<compile_context>
chip_gen: v5e
topology: v5e:2x2
jax: 0.10.0
libtpu: 0.0.40
codegen_flags: <defaults>
</compile_context>

<pallas_src>
import jax
import jax.numpy as jnp
from jax import lax
from jax.experimental import pallas as pl
from jax.experimental.pallas import tpu as pltpu


def _pick_batch_block(n, cap=8):
    nb = min(n, cap)
    while n % nb:
        nb -= 1
    return nb


def _make_kernel(Nb, H, W, Cin, Cmid, Cout, compute_dtype):
    WCin, WCmid, WCout = W * Cin, W * Cmid, W * Cout
    PCin, PCmid = (W + 2) * Cin, (W + 2) * Cmid      # haloed lane widths
    K1, K2 = 9 * WCin, 9 * WCmid

    def _zero_halo(scr, C, PC):
        # Top / bottom halo rows: two full-lane-width stores.
        scr[:, 0:1, :] = jnp.zeros((Nb, 1, PC), scr.dtype)
        scr[:, H + 1:H + 2, :] = jnp.zeros((Nb, 1, PC), scr.dtype)
        # Left / right halo pixel columns: two narrow stores spanning all rows.
        scr[:, :, 0:C] = jnp.zeros((Nb, H + 2, C), scr.dtype)
        scr[:, :, PC - C:PC] = jnp.zeros((Nb, H + 2, C), scr.dtype)

    def _im2col(scr, cols, C, WC):
        # Static-offset tap copies (no lane concatenate): tap (ky, kx) is a contiguous
        # (Nb, H, W*C) slab of the haloed scratch, stored at a static lane offset of cols.
        for ky in range(3):
            for kx in range(3):
                t = ky * 3 + kx
                cols[:, :, t * WC:(t + 1) * WC] = (
                    scr[:, ky:ky + H, kx * C:kx * C + WC].astype(cols.dtype))

    def kernel(x_ref, w1_ref, b1_ref, w2_ref, b2_ref, out_ref,
               x_scr, mid_scr, cols1, cols2):
        # ---- stage input into a zero-haloed, lane-dense scratch ----
        _zero_halo(x_scr, Cin, PCin)
        x_scr[:, 1:H + 1, Cin:Cin + WCin] = x_ref[...].astype(x_scr.dtype)

        # ---- conv1: width-packed im2col -> ONE MXU matmul with 128 dense output lanes ----
        _im2col(x_scr, cols1, Cin, WCin)
        y1 = jnp.dot(cols1[...].reshape(Nb * H, K1), w1_ref[...],
                     preferred_element_type=jnp.float32)
        y1 = jnp.maximum(y1 + b1_ref[...], 0.0)            # bias + ReLU in f32

        # ---- stage conv1 activations (lane-dense, haloed) for conv2 ----
        _zero_halo(mid_scr, Cmid, PCmid)
        mid_scr[:, 1:H + 1, Cmid:Cmid + WCmid] = (
            y1.reshape(Nb, H, WCmid).astype(mid_scr.dtype))

        # ---- conv2 ----
        _im2col(mid_scr, cols2, Cmid, WCmid)
        y2 = jnp.dot(cols2[...].reshape(Nb * H, K2), w2_ref[...],
                     preferred_element_type=jnp.float32)
        y2 = jnp.maximum(y2 + b2_ref[...], 0.0)

        # ---- lane-dense output store: (Nb, H, W*Cout); no minor-dim reshape needed ----
        out_ref[...] = y2.reshape(Nb, H, WCout).astype(out_ref.dtype)

    return kernel


def pack_conv_block_params(w1_oihw, b1, w2_oihw, b2, width, compute_dtype=jnp.bfloat16):
    """Pack PyTorch-layout (OIHW) 3x3 weights into width-packed im2col matrices.

    Done ONCE outside the hot path.  Returns (w1_big, b1_row, w2_big, b2_row):
      w_big[(ky*3+kx)*W*ci + w'*ci + i,  w*co + o] = w_hwio[ky, kx, i, o] * delta(w' == w)
    """
    assert w1_oihw.shape[2:] == (3, 3) and w2_oihw.shape[2:] == (3, 3)
    cmid, cin = w1_oihw.shape[0], w1_oihw.shape[1]
    cout = w2_oihw.shape[0]
    eye = jnp.eye(width, dtype=jnp.float32)

    def pack(w_oihw, ci, co):
        w_r = jnp.transpose(w_oihw, (2, 3, 1, 0)).reshape(9, ci, co)     # (k, ci, co)
        big = jnp.einsum('kio,wu->kwiuo', w_r, eye)                      # (k, w', ci, w, co)
        return big.reshape(9 * width * ci, width * co).astype(compute_dtype)

    b1_row = jnp.tile(b1.astype(jnp.float32), width).reshape(1, width * cmid)
    b2_row = jnp.tile(b2.astype(jnp.float32), width).reshape(1, width * cout)
    return pack(w1_oihw, cin, cmid), b1_row, pack(w2_oihw, cmid, cout), b2_row


def conv_block_apply_nchw(x_nchw, w1_big, b1_row, w2_big, b2_row, batch_block=None):
    """Fused conv->relu->conv->relu on NCHW input using pre-packed weights."""
    N, Cin, H, W = x_nchw.shape
    Cmid = b1_row.shape[1] // W
    Cout = b2_row.shape[1] // W
    compute_dtype = w1_big.dtype

    Nb = _pick_batch_block(N) if batch_block is None else batch_block
    assert N % Nb == 0, "batch_block must divide N"

    # Lane-dense input layout: channels folded into lanes (one-time layout op outside the
    # kernel; in a full UNet activations would stay in this layout between blocks).
    x_lane = jnp.transpose(x_nchw, (0, 2, 3, 1)).reshape(N, H, W * Cin)

    kernel = _make_kernel(Nb, H, W, Cin, Cmid, Cout, compute_dtype)
    K1, K2 = 9 * W * Cin, 9 * W * Cmid

    itemsize = x_nchw.dtype.itemsize
    flops = 2 * N * H * (K1 * (W * Cmid) + K2 * (W * Cout))
    bytes_accessed = (N * H * W * Cin * itemsize
                      + N * H * W * Cout * itemsize
                      + w1_big.size * w1_big.dtype.itemsize
                      + w2_big.size * w2_big.dtype.itemsize
                      + (b1_row.size + b2_row.size) * 4)

    out = pl.pallas_call(
        kernel,
        out_shape=jax.ShapeDtypeStruct((N, H, W * Cout), x_nchw.dtype),
        grid_spec=pltpu.PrefetchScalarGridSpec(
            num_scalar_prefetch=0,
            grid=(N // Nb,),
            in_specs=[
                pl.BlockSpec((Nb, H, W * Cin), lambda n: (n, 0, 0)),
                pl.BlockSpec((K1, W * Cmid), lambda n: (0, 0)),
                pl.BlockSpec((1, W * Cmid), lambda n: (0, 0)),
                pl.BlockSpec((K2, W * Cout), lambda n: (0, 0)),
                pl.BlockSpec((1, W * Cout), lambda n: (0, 0)),
            ],
            out_specs=pl.BlockSpec((Nb, H, W * Cout), lambda n: (n, 0, 0)),
            scratch_shapes=[
                pltpu.VMEM((Nb, H + 2, (W + 2) * Cin), jnp.float32),   # haloed input staging
                pltpu.VMEM((Nb, H + 2, (W + 2) * Cmid), jnp.float32),  # haloed mid staging
                pltpu.VMEM((Nb, H, K1), compute_dtype),                # im2col for conv1
                pltpu.VMEM((Nb, H, K2), compute_dtype),                # im2col for conv2
            ],
        ),
        compiler_params=pltpu.CompilerParams(
            dimension_semantics=("parallel",),
        ),
        cost_estimate=pl.CostEstimate(flops=flops, transcendentals=0,
                                      bytes_accessed=bytes_accessed),
    )(x_lane, w1_big, b1_row, w2_big, b2_row)

    # (N, H, W*Cout) -> NCHW (row-major reshape + transpose, outside the kernel).
    return jnp.transpose(out.reshape(N, H, W, Cout), (0, 3, 1, 2))


def conv_block_nchw(x_nchw, w1_oihw, b1, w2_oihw, b2, compute_dtype=jnp.bfloat16):
    """Convenience one-shot wrapper matching the PyTorch conv_block.forward semantics."""
    packed = pack_conv_block_params(w1_oihw, b1, w2_oihw, b2, x_nchw.shape[3], compute_dtype)
    return conv_block_apply_nchw(x_nchw, *packed)


def ref_conv_block_nchw(x_nchw, w1_oihw, b1, w2_oihw, b2):
    """Pure-JAX reference (same semantics as the PyTorch module)."""
    dn = ("NCHW", "OIHW", "NCHW")
    y = lax.conv_general_dilated(x_nchw, w1_oihw, (1, 1), "SAME", dimension_numbers=dn)
    y = jnp.maximum(y + b1[None, :, None, None], 0.0)
    y = lax.conv_general_dilated(y, w2_oihw, (1, 1), "SAME", dimension_numbers=dn)
    return jnp.maximum(y + b2[None, :, None, None], 0.0)


if __name__ == "__main__":
    key = jax.random.PRNGKey(0)
    N, Cin, H, W = 2, 4, 16, 16
    Cout = 8  # "out" channels of the conv_block

    k1, k2, k3, k4, k5 = jax.random.split(key, 5)
    x = jax.random.normal(k1, (N, Cin, H, W), jnp.float32)
    w1 = jax.random.normal(k2, (Cout, Cin, 3, 3), jnp.float32) * 0.1
    b1 = jax.random.normal(k3, (Cout,), jnp.float32) * 0.1
    w2 = jax.random.normal(k4, (Cout, Cout, 3, 3), jnp.float32) * 0.1
    b2 = jax.random.normal(k5, (Cout,), jnp.float32) * 0.1

    ref = ref_conv_block_nchw(x, w1, b1, w2, b2)

    fwd = jax.jit(conv_block_apply_nchw)

    # f32 MXU path: strict check against the XLA reference.
    p_f32 = pack_conv_block_params(w1, b1, w2, b2, W, compute_dtype=jnp.float32)
    out_f32 = jax.block_until_ready(fwd(x, *p_f32))
    assert out_f32.shape == (N, Cout, H, W)
    assert jnp.allclose(out_f32, ref, atol=2e-3, rtol=2e-3), "f32 mismatch vs reference"

    # bf16 MXU path (fast path on v6e/v7x): looser tolerance.
    p_bf16 = pack_conv_block_params(w1, b1, w2, b2, W, compute_dtype=jnp.bfloat16)
    out_bf16 = jax.block_until_ready(fwd(x, *p_bf16))
    assert out_bf16.shape == (N, Cout, H, W)
    assert jnp.allclose(out_bf16, ref, atol=3e-2, rtol=3e-2), "bf16 mismatch vs reference"

    print("KERNEL_OK")
</pallas_src>

<mosaic_0001>
module attributes {stable_mosaic.version = 11 : i64} {
  func.func @kernel(%arg0: i32, %arg1: memref<2x16x64xf32, #tpu.memory_space<vmem>>, %arg2: memref<576x128xf32, #tpu.memory_space<vmem>>, %arg3: memref<1x128xf32, #tpu.memory_space<vmem>>, %arg4: memref<1152x128xf32, #tpu.memory_space<vmem>>, %arg5: memref<1x128xf32, #tpu.memory_space<vmem>>, %arg6: memref<2x16x128xf32, #tpu.memory_space<vmem>>, %arg7: memref<2x18x72xf32, #tpu.memory_space<vmem>>, %arg8: memref<2x18x144xf32, #tpu.memory_space<vmem>>, %arg9: memref<2x16x576xf32, #tpu.memory_space<vmem>>, %arg10: memref<2x16x1152xf32, #tpu.memory_space<vmem>>) attributes {dimension_semantics = [#tpu.dimension_semantics<parallel>], iteration_bounds = array<i64: 1>, scalar_prefetch = 0 : i64, scratch_operands = 4 : i64, tpu.core_type = #tpu.core_type<tc>, window_params = [{transform_indices = @transform_0, window_bounds = array<i64: 2, 16, 64>}, {pipeline_mode = #tpu.pipeline_mode<synchronous>, transform_indices = @transform_1, window_bounds = array<i64: 576, 128>}, {pipeline_mode = #tpu.pipeline_mode<synchronous>, transform_indices = @transform_2, window_bounds = array<i64: 1, 128>}, {pipeline_mode = #tpu.pipeline_mode<synchronous>, transform_indices = @transform_3, window_bounds = array<i64: 1152, 128>}, {pipeline_mode = #tpu.pipeline_mode<synchronous>, transform_indices = @transform_4, window_bounds = array<i64: 1, 128>}, {transform_indices = @transform_5, window_bounds = array<i64: 2, 16, 128>}]} {
    %cst = arith.constant 0.000000e+00 : f32
    %0 = vector.broadcast %cst : f32 to vector<2x1x72xf32>
    %c0 = arith.constant 0 : index
    %c0_0 = arith.constant 0 : index
    %c0_1 = arith.constant 0 : index
    %1 = vector.load %arg7[%c0, %c0_0, %c0_1] : memref<2x18x72xf32, #tpu.memory_space<vmem>>, vector<2x1x72xf32>
    tpu.vector_store %arg7[%c0, %c0_0, %c0_1], %0 {strides = array<i32>} : memref<2x18x72xf32, #tpu.memory_space<vmem>>, vector<2x1x72xf32>,
    %cst_2 = arith.constant 0.000000e+00 : f32
    %2 = vector.broadcast %cst_2 : f32 to vector<2x1x72xf32>
    %c0_3 = arith.constant 0 : index
    %c17 = arith.constant 17 : index
    %c0_4 = arith.constant 0 : index
    %3 = vector.load %arg7[%c0_3, %c17, %c0_4] : memref<2x18x72xf32, #tpu.memory_space<vmem>>, vector<2x1x72xf32>
    tpu.vector_store %arg7[%c0_3, %c17, %c0_4], %2 {strides = array<i32>} : memref<2x18x72xf32, #tpu.memory_space<vmem>>, vector<2x1x72xf32>,
    %cst_5 = arith.constant 0.000000e+00 : f32
    %4 = vector.broadcast %cst_5 : f32 to vector<2x18x4xf32>
    %c0_6 = arith.constant 0 : index
    %c0_7 = arith.constant 0 : index
    %c0_8 = arith.constant 0 : index
    %5 = vector.load %arg7[%c0_6, %c0_7, %c0_8] : memref<2x18x72xf32, #tpu.memory_space<vmem>>, vector<2x18x4xf32>
    tpu.vector_store %arg7[%c0_6, %c0_7, %c0_8], %4 {strides = array<i32>} : memref<2x18x72xf32, #tpu.memory_space<vmem>>, vector<2x18x4xf32>,
    %cst_9 = arith.constant 0.000000e+00 : f32
    %6 = vector.broadcast %cst_9 : f32 to vector<2x18x4xf32>
    %c0_10 = arith.constant 0 : index
    %c0_11 = arith.constant 0 : index
    %c68 = arith.constant 68 : index
    %7 = vector.load %arg7[%c0_10, %c0_11, %c68] : memref<2x18x72xf32, #tpu.memory_space<vmem>>, vector<2x18x4xf32>
    tpu.vector_store %arg7[%c0_10, %c0_11, %c68], %6 {strides = array<i32>} : memref<2x18x72xf32, #tpu.memory_space<vmem>>, vector<2x18x4xf32>,
    %c0_12 = arith.constant 0 : index
    %c0_13 = arith.constant 0 : index
    %c0_14 = arith.constant 0 : index
    %8 = vector.load %arg1[%c0_12, %c0_13, %c0_14] : memref<2x16x64xf32, #tpu.memory_space<vmem>>, vector<2x16x64xf32>
    %c0_15 = arith.constant 0 : index
    %c1 = arith.constant 1 : index
    %c4 = arith.constant 4 : index
    %9 = vector.load %arg7[%c0_15, %c1, %c4] : memref<2x18x72xf32, #tpu.memory_space<vmem>>, vector<2x16x64xf32>
    tpu.vector_store %arg7[%c0_15, %c1, %c4], %8 {strides = array<i32>} : memref<2x18x72xf32, #tpu.memory_space<vmem>>, vector<2x16x64xf32>,
    %c0_16 = arith.constant 0 : index
    %c0_17 = arith.constant 0 : index
    %c0_18 = arith.constant 0 : index
    %10 = vector.load %arg7[%c0_16, %c0_17, %c0_18] : memref<2x18x72xf32, #tpu.memory_space<vmem>>, vector<2x16x64xf32>
    %c0_19 = arith.constant 0 : index
    %c0_20 = arith.constant 0 : index
    %c0_21 = arith.constant 0 : index
    %11 = vector.load %arg9[%c0_19, %c0_20, %c0_21] : memref<2x16x576xf32, #tpu.memory_space<vmem>>, vector<2x16x64xf32>
    tpu.vector_store %arg9[%c0_19, %c0_20, %c0_21], %10 {strides = array<i32>} : memref<2x16x576xf32, #tpu.memory_space<vmem>>, vector<2x16x64xf32>,
    %c0_22 = arith.constant 0 : index
    %c0_23 = arith.constant 0 : index
    %c4_24 = arith.constant 4 : index
    %12 = vector.load %arg7[%c0_22, %c0_23, %c4_24] : memref<2x18x72xf32, #tpu.memory_space<vmem>>, vector<2x16x64xf32>
    %c0_25 = arith.constant 0 : index
    %c0_26 = arith.constant 0 : index
    %c64 = arith.constant 64 : index
    %13 = vector.load %arg9[%c0_25, %c0_26, %c64] : memref<2x16x576xf32, #tpu.memory_space<vmem>>, vector<2x16x64xf32>
    tpu.vector_store %arg9[%c0_25, %c0_26, %c64], %12 {strides = array<i32>} : memref<2x16x576xf32, #tpu.memory_space<vmem>>, vector<2x16x64xf32>,
    %c0_27 = arith.constant 0 : index
    %c0_28 = arith.constant 0 : index
    %c8 = arith.constant 8 : index
    %14 = vector.load %arg7[%c0_27, %c0_28, %c8] : memref<2x18x72xf32, #tpu.memory_space<vmem>>, vector<2x16x64xf32>
    %c0_29 = arith.constant 0 : index
    %c0_30 = arith.constant 0 : index
    %c128 = arith.constant 128 : index
    %15 = vector.load %arg9[%c0_29, %c0_30, %c128] : memref<2x16x576xf32, #tpu.memory_space<vmem>>, vector<2x16x64xf32>
    tpu.vector_store %arg9[%c0_29, %c0_30, %c128], %14 {strides = array<i32>} : memref<2x16x576xf32, #tpu.memory_space<vmem>>, vector<2x16x64xf32>,
    %c0_31 = arith.constant 0 : index
    %c1_32 = arith.constant 1 : index
    %c0_33 = arith.constant 0 : index
    %16 = vector.load %arg7[%c0_31, %c1_32, %c0_33] : memref<2x18x72xf32, #tpu.memory_space<vmem>>, vector<2x16x64xf32>
    %c0_34 = arith.constant 0 : index
    %c0_35 = arith.constant 0 : index
    %c192 = arith.constant 192 : index
    %17 = vector.load %arg9[%c0_34, %c0_35, %c192] : memref<2x16x576xf32, #tpu.memory_space<vmem>>, vector<2x16x64xf32>
    tpu.vector_store %arg9[%c0_34, %c0_35, %c192], %16 {strides = array<i32>} : memref<2x16x576xf32, #tpu.memory_space<vmem>>, vector<2x16x64xf32>,
    %c0_36 = arith.constant 0 : index
    %c1_37 = arith.constant 1 : index
    %c4_38 = arith.constant 4 : index
    %18 = vector.load %arg7[%c0_36, %c1_37, %c4_38] : memref<2x18x72xf32, #tpu.memory_space<vmem>>, vector<2x16x64xf32>
    %c0_39 = arith.constant 0 : index
    %c0_40 = arith.constant 0 : index
    %c256 = arith.constant 256 : index
    %19 = vector.load %arg9[%c0_39, %c0_40, %c256] : memref<2x16x576xf32, #tpu.memory_space<vmem>>, vector<2x16x64xf32>
    tpu.vector_store %arg9[%c0_39, %c0_40, %c256], %18 {strides = array<i32>} : memref<2x16x576xf32, #tpu.memory_space<vmem>>, vector<2x16x64xf32>,
    %c0_41 = arith.constant 0 : index
    %c1_42 = arith.constant 1 : index
    %c8_43 = arith.constant 8 : index
    %20 = vector.load %arg7[%c0_41, %c1_42, %c8_43] : memref<2x18x72xf32, #tpu.memory_space<vmem>>, vector<2x16x64xf32>
    %c0_44 = arith.constant 0 : index
    %c0_45 = arith.constant 0 : index
    %c320 = arith.constant 320 : index
    %21 = vector.load %arg9[%c0_44, %c0_45, %c320] : memref<2x16x576xf32, #tpu.memory_space<vmem>>, vector<2x16x64xf32>
    tpu.vector_store %arg9[%c0_44, %c0_45, %c320], %20 {strides = array<i32>} : memref<2x16x576xf32, #tpu.memory_space<vmem>>, vector<2x16x64xf32>,
    %c0_46 = arith.constant 0 : index
    %c2 = arith.constant 2 : index
    %c0_47 = arith.constant 0 : index
    %22 = vector.load %arg7[%c0_46, %c2, %c0_47] : memref<2x18x72xf32, #tpu.memory_space<vmem>>, vector<2x16x64xf32>
    %c0_48 = arith.constant 0 : index
    %c0_49 = arith.constant 0 : index
    %c384 = arith.constant 384 : index
    %23 = vector.load %arg9[%c0_48, %c0_49, %c384] : memref<2x16x576xf32, #tpu.memory_space<vmem>>, vector<2x16x64xf32>
    tpu.vector_store %arg9[%c0_48, %c0_49, %c384], %22 {strides = array<i32>} : memref<2x16x576xf32, #tpu.memory_space<vmem>>, vector<2x16x64xf32>,
    %c0_50 = arith.constant 0 : index
    %c2_51 = arith.constant 2 : index
    %c4_52 = arith.constant 4 : index
    %24 = vector.load %arg7[%c0_50, %c2_51, %c4_52] : memref<2x18x72xf32, #tpu.memory_space<vmem>>, vector<2x16x64xf32>
    %c0_53 = arith.constant 0 : index
    %c0_54 = arith.constant 0 : index
    %c448 = arith.constant 448 : index
    %25 = vector.load %arg9[%c0_53, %c0_54, %c448] : memref<2x16x576xf32, #tpu.memory_space<vmem>>, vector<2x16x64xf32>
    tpu.vector_store %arg9[%c0_53, %c0_54, %c448], %24 {strides = array<i32>} : memref<2x16x576xf32, #tpu.memory_space<vmem>>, vector<2x16x64xf32>,
    %c0_55 = arith.constant 0 : index
    %c2_56 = arith.constant 2 : index
    %c8_57 = arith.constant 8 : index
    %26 = vector.load %arg7[%c0_55, %c2_56, %c8_57] : memref<2x18x72xf32, #tpu.memory_space<vmem>>, vector<2x16x64xf32>
    %c0_58 = arith.constant 0 : index
    %c0_59 = arith.constant 0 : index
    %c512 = arith.constant 512 : index
    %27 = vector.load %arg9[%c0_58, %c0_59, %c512] : memref<2x16x576xf32, #tpu.memory_space<vmem>>, vector<2x16x64xf32>
    tpu.vector_store %arg9[%c0_58, %c0_59, %c512], %26 {strides = array<i32>} : memref<2x16x576xf32, #tpu.memory_space<vmem>>, vector<2x16x64xf32>,
    %c0_60 = arith.constant 0 : index
    %c0_61 = arith.constant 0 : index
    %c0_62 = arith.constant 0 : index
    %28 = vector.load %arg9[%c0_60, %c0_61, %c0_62] : memref<2x16x576xf32, #tpu.memory_space<vmem>>, vector<2x16x576xf32>
    %29 = vector.shape_cast %28 : vector<2x16x576xf32> to vector<32x576xf32>
    %c0_63 = arith.constant 0 : index
    %c0_64 = arith.constant 0 : index
    %30 = vector.load %arg2[%c0_63, %c0_64] : memref<576x128xf32, #tpu.memory_space<vmem>>, vector<576x128xf32>
    %cst_65 = arith.constant dense<0.000000e+00> : vector<32x128xf32>
    %31 = tpu.matmul %29, %30, %cst_65 {dimension_numbers = #tpu.dot_dimension_numbers<[1], [0], [0], [1], [0, 0, 1, 1], [], []>} : vector<32x576xf32>, vector<576x128xf32>, vector<32x128xf32> -> vector<32x128xf32>
    %c0_66 = arith.constant 0 : index
    %c0_67 = arith.constant 0 : index
    %32 = vector.load %arg3[%c0_66, %c0_67] : memref<1x128xf32, #tpu.memory_space<vmem>>, vector<1x128xf32>
    %33 = vector.broadcast %32 : vector<1x128xf32> to vector<32x128xf32>
    %34 = arith.addf %31, %33 : vector<32x128xf32>
    %cst_68 = arith.constant 0.000000e+00 : f32
    %35 = vector.broadcast %cst_68 : f32 to vector<32x128xf32>
    %36 = arith.maximumf %34, %35 : vector<32x128xf32>
    %cst_69 = arith.constant 0.000000e+00 : f32
    %37 = vector.broadcast %cst_69 : f32 to vector<2x1x144xf32>
    %c0_70 = arith.constant 0 : index
    %c0_71 = arith.constant 0 : index
    %c0_72 = arith.constant 0 : index
    %38 = vector.load %arg8[%c0_70, %c0_71, %c0_72] : memref<2x18x144xf32, #tpu.memory_space<vmem>>, vector<2x1x144xf32>
    tpu.vector_store %arg8[%c0_70, %c0_71, %c0_72], %37 {strides = array<i32>} : memref<2x18x144xf32, #tpu.memory_space<vmem>>, vector<2x1x144xf32>,
    %cst_73 = arith.constant 0.000000e+00 : f32
    %39 = vector.broadcast %cst_73 : f32 to vector<2x1x144xf32>
    %c0_74 = arith.constant 0 : index
    %c17_75 = arith.constant 17 : index
    %c0_76 = arith.constant 0 : index
    %40 = vector.load %arg8[%c0_74, %c17_75, %c0_76] : memref<2x18x144xf32, #tpu.memory_space<vmem>>, vector<2x1x144xf32>
    tpu.vector_store %arg8[%c0_74, %c17_75, %c0_76], %39 {strides = array<i32>} : memref<2x18x144xf32, #tpu.memory_space<vmem>>, vector<2x1x144xf32>,
    %cst_77 = arith.constant 0.000000e+00 : f32
    %41 = vector.broadcast %cst_77 : f32 to vector<2x18x8xf32>
    %c0_78 = arith.constant 0 : index
    %c0_79 = arith.constant 0 : index
    %c0_80 = arith.constant 0 : index
    %42 = vector.load %arg8[%c0_78, %c0_79, %c0_80] : memref<2x18x144xf32, #tpu.memory_space<vmem>>, vector<2x18x8xf32>
    tpu.vector_store %arg8[%c0_78, %c0_79, %c0_80], %41 {strides = array<i32>} : memref<2x18x144xf32, #tpu.memory_space<vmem>>, vector<2x18x8xf32>,
    %cst_81 = arith.constant 0.000000e+00 : f32
    %43 = vector.broadcast %cst_81 : f32 to vector<2x18x8xf32>
    %c0_82 = arith.constant 0 : index
    %c0_83 = arith.constant 0 : index
    %c136 = arith.constant 136 : index
    %44 = vector.load %arg8[%c0_82, %c0_83, %c136] : memref<2x18x144xf32, #tpu.memory_space<vmem>>, vector<2x18x8xf32>
    tpu.vector_store %arg8[%c0_82, %c0_83, %c136], %43 {strides = array<i32>} : memref<2x18x144xf32, #tpu.memory_space<vmem>>, vector<2x18x8xf32>,
    %45 = vector.shape_cast %36 : vector<32x128xf32> to vector<2x16x128xf32>
    %c0_84 = arith.constant 0 : index
    %c1_85 = arith.constant 1 : index
    %c8_86 = arith.constant 8 : index
    %46 = vector.load %arg8[%c0_84, %c1_85, %c8_86] : memref<2x18x144xf32, #tpu.memory_space<vmem>>, vector<2x16x128xf32>
    tpu.vector_store %arg8[%c0_84, %c1_85, %c8_86], %45 {strides = array<i32>} : memref<2x18x144xf32, #tpu.memory_space<vmem>>, vector<2x16x128xf32>,
    %c0_87 = arith.constant 0 : index
    %c0_88 = arith.constant 0 : index
    %c0_89 = arith.constant 0 : index
    %47 = vector.load %arg8[%c0_87, %c0_88, %c0_89] : memref<2x18x144xf32, #tpu.memory_space<vmem>>, vector<2x16x128xf32>
    %c0_90 = arith.constant 0 : index
    %c0_91 = arith.constant 0 : index
    %c0_92 = arith.constant 0 : index
    %48 = vector.load %arg10[%c0_90, %c0_91, %c0_92] : memref<2x16x1152xf32, #tpu.memory_space<vmem>>, vector<2x16x128xf32>
    tpu.vector_store %arg10[%c0_90, %c0_91, %c0_92], %47 {strides = array<i32>} : memref<2x16x1152xf32, #tpu.memory_space<vmem>>, vector<2x16x128xf32>,
    %c0_93 = arith.constant 0 : index
    %c0_94 = arith.constant 0 : index
    %c8_95 = arith.constant 8 : index
    %49 = vector.load %arg8[%c0_93, %c0_94, %c8_95] : memref<2x18x144xf32, #tpu.memory_space<vmem>>, vector<2x16x128xf32>
    %c0_96 = arith.constant 0 : index
    %c0_97 = arith.constant 0 : index
    %c128_98 = arith.constant 128 : index
    %50 = vector.load %arg10[%c0_96, %c0_97, %c128_98] : memref<2x16x1152xf32, #tpu.memory_space<vmem>>, vector<2x16x128xf32>
    tpu.vector_store %arg10[%c0_96, %c0_97, %c128_98], %49 {strides = array<i32>} : memref<2x16x1152xf32, #tpu.memory_space<vmem>>, vector<2x16x128xf32>,
    %c0_99 = arith.constant 0 : index
    %c0_100 = arith.constant 0 : index
    %c16 = arith.constant 16 : index
    %51 = vector.load %arg8[%c0_99, %c0_100, %c16] : memref<2x18x144xf32, #tpu.memory_space<vmem>>, vector<2x16x128xf32>
    %c0_101 = arith.constant 0 : index
    %c0_102 = arith.constant 0 : index
    %c256_103 = arith.constant 256 : index
    %52 = vector.load %arg10[%c0_101, %c0_102, %c256_103] : memref<2x16x1152xf32, #tpu.memory_space<vmem>>, vector<2x16x128xf32>
    tpu.vector_store %arg10[%c0_101, %c0_102, %c256_103], %51 {strides = array<i32>} : memref<2x16x1152xf32, #tpu.memory_space<vmem>>, vector<2x16x128xf32>,
    %c0_104 = arith.constant 0 : index
    %c1_105 = arith.constant 1 : index
    %c0_106 = arith.constant 0 : index
    %53 = vector.load %arg8[%c0_104, %c1_105, %c0_106] : memref<2x18x144xf32, #tpu.memory_space<vmem>>, vector<2x16x128xf32>
    %c0_107 = arith.constant 0 : index
    %c0_108 = arith.constant 0 : index
    %c384_109 = arith.constant 384 : index
    %54 = vector.load %arg10[%c0_107, %c0_108, %c384_109] : memref<2x16x1152xf32, #tpu.memory_space<vmem>>, vector<2x16x128xf32>
    tpu.vector_store %arg10[%c0_107, %c0_108, %c384_109], %53 {strides = array<i32>} : memref<2x16x1152xf32, #tpu.memory_space<vmem>>, vector<2x16x128xf32>,
    %c0_110 = arith.constant 0 : index
    %c1_111 = arith.constant 1 : index
    %c8_112 = arith.constant 8 : index
    %55 = vector.load %arg8[%c0_110, %c1_111, %c8_112] : memref<2x18x144xf32, #tpu.memory_space<vmem>>, vector<2x16x128xf32>
    %c0_113 = arith.constant 0 : index
    %c0_114 = arith.constant 0 : index
    %c512_115 = arith.constant 512 : index
    %56 = vector.load %arg10[%c0_113, %c0_114, %c512_115] : memref<2x16x1152xf32, #tpu.memory_space<vmem>>, vector<2x16x128xf32>
    tpu.vector_store %arg10[%c0_113, %c0_114, %c512_115], %55 {strides = array<i32>} : memref<2x16x1152xf32, #tpu.memory_space<vmem>>, vector<2x16x128xf32>,
    %c0_116 = arith.constant 0 : index
    %c1_117 = arith.constant 1 : index
    %c16_118 = arith.constant 16 : index
    %57 = vector.load %arg8[%c0_116, %c1_117, %c16_118] : memref<2x18x144xf32, #tpu.memory_space<vmem>>, vector<2x16x128xf32>
    %c0_119 = arith.constant 0 : index
    %c0_120 = arith.constant 0 : index
    %c640 = arith.constant 640 : index
    %58 = vector.load %arg10[%c0_119, %c0_120, %c640] : memref<2x16x1152xf32, #tpu.memory_space<vmem>>, vector<2x16x128xf32>
    tpu.vector_store %arg10[%c0_119, %c0_120, %c640], %57 {strides = array<i32>} : memref<2x16x1152xf32, #tpu.memory_space<vmem>>, vector<2x16x128xf32>,
    %c0_121 = arith.constant 0 : index
    %c2_122 = arith.constant 2 : index
    %c0_123 = arith.constant 0 : index
    %59 = vector.load %arg8[%c0_121, %c2_122, %c0_123] : memref<2x18x144xf32, #tpu.memory_space<vmem>>, vector<2x16x128xf32>
    %c0_124 = arith.constant 0 : index
    %c0_125 = arith.constant 0 : index
    %c768 = arith.constant 768 : index
    %60 = vector.load %arg10[%c0_124, %c0_125, %c768] : memref<2x16x1152xf32, #tpu.memory_space<vmem>>, vector<2x16x128xf32>
    tpu.vector_store %arg10[%c0_124, %c0_125, %c768], %59 {strides = array<i32>} : memref<2x16x1152xf32, #tpu.memory_space<vmem>>, vector<2x16x128xf32>,
    %c0_126 = arith.constant 0 : index
    %c2_127 = arith.constant 2 : index
    %c8_128 = arith.constant 8 : index
    %61 = vector.load %arg8[%c0_126, %c2_127, %c8_128] : memref<2x18x144xf32, #tpu.memory_space<vmem>>, vector<2x16x128xf32>
    %c0_129 = arith.constant 0 : index
    %c0_130 = arith.constant 0 : index
    %c896 = arith.constant 896 : index
    %62 = vector.load %arg10[%c0_129, %c0_130, %c896] : memref<2x16x1152xf32, #tpu.memory_space<vmem>>, vector<2x16x128xf32>
    tpu.vector_store %arg10[%c0_129, %c0_130, %c896], %61 {strides = array<i32>} : memref<2x16x1152xf32, #tpu.memory_space<vmem>>, vector<2x16x128xf32>,
    %c0_131 = arith.constant 0 : index
    %c2_132 = arith.constant 2 : index
    %c16_133 = arith.constant 16 : index
    %63 = vector.load %arg8[%c0_131, %c2_132, %c16_133] : memref<2x18x144xf32, #tpu.memory_space<vmem>>, vector<2x16x128xf32>
    %c0_134 = arith.constant 0 : index
    %c0_135 = arith.constant 0 : index
    %c1024 = arith.constant 1024 : index
    %64 = vector.load %arg10[%c0_134, %c0_135, %c1024] : memref<2x16x1152xf32, #tpu.memory_space<vmem>>, vector<2x16x128xf32>
    tpu.vector_store %arg10[%c0_134, %c0_135, %c1024], %63 {strides = array<i32>} : memref<2x16x1152xf32, #tpu.memory_space<vmem>>, vector<2x16x128xf32>,
    %c0_136 = arith.constant 0 : index
    %c0_137 = arith.constant 0 : index
    %c0_138 = arith.constant 0 : index
    %65 = vector.load %arg10[%c0_136, %c0_137, %c0_138] : memref<2x16x1152xf32, #tpu.memory_space<vmem>>, vector<2x16x1152xf32>
    %66 = vector.shape_cast %65 : vector<2x16x1152xf32> to vector<32x1152xf32>
    %c0_139 = arith.constant 0 : index
    %c0_140 = arith.constant 0 : index
    %67 = vector.load %arg4[%c0_139, %c0_140] : memref<1152x128xf32, #tpu.memory_space<vmem>>, vector<1152x128xf32>
    %cst_141 = arith.constant dense<0.000000e+00> : vector<32x128xf32>
    %68 = tpu.matmul %66, %67, %cst_141 {dimension_numbers = #tpu.dot_dimension_numbers<[1], [0], [0], [1], [0, 0, 1, 1], [], []>} : vector<32x1152xf32>, vector<1152x128xf32>, vector<32x128xf32> -> vector<32x128xf32>
    %c0_142 = arith.constant 0 : index
    %c0_143 = arith.constant 0 : index
    %69 = vector.load %arg5[%c0_142, %c0_143] : memref<1x128xf32, #tpu.memory_space<vmem>>, vector<1x128xf32>
    %70 = vector.broadcast %69 : vector<1x128xf32> to vector<32x128xf32>
    %71 = arith.addf %68, %70 : vector<32x128xf32>
    %cst_144 = arith.constant 0.000000e+00 : f32
    %72 = vector.broadcast %cst_144 : f32 to vector<32x128xf32>
    %73 = arith.maximumf %71, %72 : vector<32x128xf32>
    %74 = vector.shape_cast %73 : vector<32x128xf32> to vector<2x16x128xf32>
    %c0_145 = arith.constant 0 : index
    %c0_146 = arith.constant 0 : index
    %c0_147 = arith.constant 0 : index
    %75 = vector.load %arg6[%c0_145, %c0_146, %c0_147] : memref<2x16x128xf32, #tpu.memory_space<vmem>>, vector<2x16x128xf32>
    tpu.vector_store %arg6[%c0_145, %c0_146, %c0_147], %74 {strides = array<i32>} : memref<2x16x128xf32, #tpu.memory_space<vmem>>, vector<2x16x128xf32>,
    return
  }
  func.func @transform_0(%arg0: i32) -> (i32, i32, i32) {
    %c0_i32 = arith.constant 0 : i32
    %c0_i32_0 = arith.constant 0 : i32
    %c0_i32_1 = arith.constant 0 : i32
    return %arg0, %c0_i32, %c0_i32_0 : i32, i32, i32
  }
  func.func @transform_1(%arg0: i32) -> (i32, i32) {
    %c0_i32 = arith.constant 0 : i32
    %c0_i32_0 = arith.constant 0 : i32
    %c0_i32_1 = arith.constant 0 : i32
    return %c0_i32, %c0_i32_0 : i32, i32
  }
  func.func @transform_2(%arg0: i32) -> (i32, i32) {
    %c0_i32 = arith.constant 0 : i32
    %c0_i32_0 = arith.constant 0 : i32
    %c0_i32_1 = arith.constant 0 : i32
    return %c0_i32, %c0_i32_0 : i32, i32
  }
  func.func @transform_3(%arg0: i32) -> (i32, i32) {
    %c0_i32 = arith.constant 0 : i32
    %c0_i32_0 = arith.constant 0 : i32
    %c0_i32_1 = arith.constant 0 : i32
    return %c0_i32, %c0_i32_0 : i32, i32
  }
  func.func @transform_4(%arg0: i32) -> (i32, i32) {
    %c0_i32 = arith.constant 0 : i32
    %c0_i32_0 = arith.constant 0 : i32
    %c0_i32_1 = arith.constant 0 : i32
    return %c0_i32, %c0_i32_0 : i32, i32
  }
  func.func @transform_5(%arg0: i32) -> (i32, i32, i32) {
    %c0_i32 = arith.constant 0 : i32
    %c0_i32_0 = arith.constant 0 : i32
    %c0_i32_1 = arith.constant 0 : i32
    return %arg0, %c0_i32, %c0_i32_0 : i32, i32, i32
  }
}

</mosaic_0001>

<llo_original>
// kernel: conv_block_apply_nchw.1
$region0: #{conv_block_apply_nchw.1}
  #allocation0 [shape = 'u32[]', space=smem, size = 0x4, offset = 0x4, fixed_abs, tag = 'smem constant byte address 0x4 - core index']
  #allocation1 [shape = 'u32[72,128]{1,0:T(1,128)}', space=vmem, size = 0x9000, scoped, tag = 'internal scratch']
  #allocation2 [shape = 'f32[2,18,72]{2,1,0:T(8,128)}', space=vmem, size = 0x6000, scoped, tag = 'scratch operand']
  #allocation3 [shape = 'f32[2,18,144]{2,1,0:T(8,128)}', space=vmem, size = 0xc000, scoped, tag = 'scratch operand']
  #allocation4 [shape = 'f32[2,16,576]{2,1,0:T(8,128)}', space=vmem, size = 0x14000, scoped, tag = 'scratch operand']
  #allocation5 [shape = 'f32[2,16,1152]{2,1,0:T(8,128)}', space=vmem, size = 0x24000, scoped, tag = 'scratch operand']
  %s0 = inlined_call_operand.vmem [shape: f32[2,16,64], index: 0, kind: input, shape index: {}]
  %s1 = inlined_call_operand.hbm [shape: f32[576,128], index: 1, kind: input, shape index: {}]
  %s2 = inlined_call_operand.vmem [shape: f32[1,128], index: 2, kind: input, shape index: {}]
  %s3 = inlined_call_operand.hbm [shape: f32[1152,128], index: 3, kind: input, shape index: {}]
  %s4 = inlined_call_operand.vmem [shape: f32[1,128], index: 4, kind: input, shape index: {}]
  %s5 = inlined_call_operand.vmem [shape: f32[2,16,128], index: 5, kind: output, shape index: {}]
  %s6 = sld [smem:[#allocation0]]
  $region38: #{conv_block_apply_nchw.1} parent=0
    _
  %s8 = ssub.s32 1, %s6
  %s9 = scalar_select 0, %s8, %s6
  $region1: #{conv_block_apply_nchw.1} parent=0
    #allocation6 [shape = 'u8[294912]{0}', space=vmem, size = 0x48000, scoped, tag = 'input window, operand 1, single buffered']
    #allocation7 [shape = 's32[1]{0}', space=sflag, size = 0x4, scoped, tag = 'scoped memory for conv_block_apply_nchw.1']
    #allocation8 [shape = 'u8[589824]{0}', space=vmem, size = 0x90000, scoped, tag = 'input window, operand 3, single buffered']
    #allocation9 [shape = 's32[1]{0}', space=sflag, size = 0x4, scoped, tag = 'scoped memory for conv_block_apply_nchw.1']
    %10 = vsyncpa [#allocation7], 0
    %11 = vsyncpa [#allocation9], 0
    // Predicated region
    $region2: #{conv_block_apply_nchw.1} parent=1 // pred_check
      _
    $region3: #{conv_block_apply_nchw.1} parent=1 // pred_check_branch
      %13 = sbr.rel (0) target = $region5
    $region4: #{conv_block_apply_nchw.1} parent=1 // pred_region
      _
    $region5: #{conv_block_apply_nchw.1} parent=1 // pred_fallthru
      _
    // Predicated region
    $region6: #{conv_block_apply_nchw.1} parent=1 // pred_check
      _
    $region7: #{conv_block_apply_nchw.1} parent=1 // pred_check_branch
      %15 = sbr.rel (0) target = $region9
    $region8: #{conv_block_apply_nchw.1} parent=1 // pred_region
      %17 = vsyncadd [#allocation7], 0
      %s18 = sshll.u32 %s1, 4
      %s19 = int_to_ptr.hbm [resolvable:$true] %s18
      %s20 = sshll.u32 [#allocation6], 4
      %s21 = int_to_ptr.vmem [resolvable:$true] %s20
      %26 = dma.hbm_to_vmem [thread:$0]  %s19, 9216, %s21, [#allocation7], 128, 128, 8
    $region9: #{conv_block_apply_nchw.1} parent=1 // pred_fallthru
      _
    // Predicated region
    $region10: #{conv_block_apply_nchw.1} parent=1 // pred_check
      _
    $region11: #{conv_block_apply_nchw.1} parent=1 // pred_check_branch
      %28 = sbr.rel (0) target = $region13
    $region12: #{conv_block_apply_nchw.1} parent=1 // pred_region
      _
    $region13: #{conv_block_apply_nchw.1} parent=1 // pred_fallthru
      _
    // Predicated region
    $region14: #{conv_block_apply_nchw.1} parent=1 // pred_check
      _
    $region15: #{conv_block_apply_nchw.1} parent=1 // pred_check_branch
      %30 = sbr.rel (0) target = $region17
    $region16: #{conv_block_apply_nchw.1} parent=1 // pred_region
      %32 = vsyncadd [#allocation9], 0
      %s33 = sshll.u32 %s3, 4
      %s34 = int_to_ptr.hbm [resolvable:$true] %s33
      %s35 = sshll.u32 [#allocation8], 4
      %s36 = int_to_ptr.vmem [resolvable:$true] %s35
      %41 = dma.hbm_to_vmem [thread:$0]  %s34, 18432, %s36, [#allocation9], 128, 128, 8
    $region17: #{conv_block_apply_nchw.1} parent=1 // pred_fallthru
      _
    // Predicated region
    $region18: #{conv_block_apply_nchw.1} parent=1 // pred_check
      _
    $region19: #{conv_block_apply_nchw.1} parent=1 // pred_check_branch
      %43 = sbr.rel (0) target = $region21
    $region20: #{conv_block_apply_nchw.1} parent=1 // pred_region
      _
    $region21: #{conv_block_apply_nchw.1} parent=1 // pred_fallthru
      _
    // Predicated region
    $region22: #{conv_block_apply_nchw.1} parent=1 // pred_check
      _
    $region23: #{conv_block_apply_nchw.1} parent=1 // pred_check_branch
      %45 = sbr.rel (0) target = $region25
    $region24: #{conv_block_apply_nchw.1} parent=1 // pred_region
      %47 = dma.done [#allocation7], 9216
    $region25: #{conv_block_apply_nchw.1} parent=1 // pred_fallthru
      _
    // Predicated region
    $region26: #{conv_block_apply_nchw.1} parent=1 // pred_check
      _
    $region27: #{conv_block_apply_nchw.1} parent=1 // pred_check_branch
      %49 = sbr.rel (0) target = $region29
    $region28: #{conv_block_apply_nchw.1} parent=1 // pred_region
      %51 = dma.done [#allocation9], 18432
    $region29: #{conv_block_apply_nchw.1} parent=1 // pred_fallthru
      _
    %vm52 = vcmask 581632
    %53 = vst.msk [vmem:[#allocation2] sm:$0x1] %vm52, 0.0
    %54 = vst.msk [vmem:[#allocation2 + $0x18] sm:$0x1] %vm52, 0.0
    %55 = vst.msk [vmem:[#allocation2 + $0x11] sm:$0x1] %vm52, 0.0
    %56 = vst.msk [vmem:[#allocation2 + $0x29] sm:$0x1] %vm52, 0.0
    %vm57 = vcmask 31744
    %58 = vst.msk [vmem:[#allocation2] sm:$0xff] %vm57, 0.0
    %59 = vst.msk [vmem:[#allocation2 + $0x8] sm:$0xff] %vm57, 0.0
    %vm60 = vcmask 25600
    %61 = vst.msk [vmem:[#allocation2 + $0x10] sm:$0x3] %vm60, 0.0
    %62 = vst.msk [vmem:[#allocation2 + $0x18] sm:$0xff] %vm57, 0.0
    %63 = vst.msk [vmem:[#allocation2 + $0x20] sm:$0xff] %vm57, 0.0
    %64 = vst.msk [vmem:[#allocation2 + $0x28] sm:$0x3] %vm60, 0.0
    %vm65 = vcmask 589344
    %66 = vst.msk [vmem:[#allocation2] sm:$0xff] %vm65, 0.0
    %67 = vst.msk [vmem:[#allocation2 + $0x8] sm:$0xff] %vm65, 0.0
    %vm68 = vcmask 583200
    %69 = vst.msk [vmem:[#allocation2 + $0x10] sm:$0x3] %vm68, 0.0
    %70 = vst.msk [vmem:[#allocation2 + $0x18] sm:$0xff] %vm65, 0.0
    %71 = vst.msk [vmem:[#allocation2 + $0x20] sm:$0xff] %vm65, 0.0
    %72 = vst.msk [vmem:[#allocation2 + $0x28] sm:$0x3] %vm68, 0.0
    %v73 = vld [vmem:[%s0] sm:$0xff]
    %v74 = vld [vmem:[%s0 + $0x8] sm:$0xff]
    %v75 = vld [vmem:[%s0 + $0x10] sm:$0xff]
    %v76 = vld [vmem:[%s0 + $0x18] sm:$0xff]
    %81 = vrot.lane.b32.xlu0 %v73, 4
    %v82 = vpop.permute.xlu0 %81
    %83 = vrot.lane.b32.xlu0 %v74, 4
    %v84 = vpop.permute.xlu0 %83
    %85 = vrot.lane.b32.xlu0 %v75, 4
    %v86 = vpop.permute.xlu0 %85
    %87 = vrot.lane.b32.xlu0 %v76, 4
    %v88 = vpop.permute.xlu0 %87
    %vm93 = vcmask 556064
    %94 = vst.msk [vmem:[#allocation2 + $0x1] sm:$0xff] %vm93, %v82
    %95 = vst.msk [vmem:[#allocation2 + $0x9] sm:$0xff] %vm93, %v84
    %96 = vst.msk [vmem:[#allocation2 + $0x19] sm:$0xff] %vm93, %v86
    %97 = vst.msk [vmem:[#allocation2 + $0x21] sm:$0xff] %vm93, %v88
    %v98 = vld [vmem:[#allocation2] sm:$0xff]
    %v99 = vld [vmem:[#allocation2 + $0x8] sm:$0xff]
    %v100 = vld [vmem:[#allocation2 + $0x18] sm:$0xff]
    %v101 = vld [vmem:[#allocation2 + $0x20] sm:$0xff]
    %vm102 = vcmask 523264
    %103 = vst.msk [vmem:[#allocation4] sm:$0xff] %vm102, %v98
    %104 = vst.msk [vmem:[#allocation4 + $0x28] sm:$0xff] %vm102, %v99
    %105 = vst.msk [vmem:[#allocation4 + $0x50] sm:$0xff] %vm102, %v100
    %106 = vst.msk [vmem:[#allocation4 + $0x78] sm:$0xff] %vm102, %v101
    %v107 = vld [vmem:[#allocation2] sm:$0xff]
    %v108 = vld [vmem:[#allocation2 + $0x8] sm:$0xff]
    %v109 = vld [vmem:[#allocation2 + $0x18] sm:$0xff]
    %v110 = vld [vmem:[#allocation2 + $0x20] sm:$0xff]
    %115 = vrot.lane.b32.xlu0 %v107, 60
    %v116 = vpop.permute.xlu0 %115
    %117 = vrot.lane.b32.xlu0 %v108, 60
    %v118 = vpop.permute.xlu0 %117
    %119 = vrot.lane.b32.xlu0 %v109, 60
    %v120 = vpop.permute.xlu0 %119
    %121 = vrot.lane.b32.xlu0 %v110, 60
    %v122 = vpop.permute.xlu0 %121
    %vm127 = vcmask 1048064
    %128 = vst.msk [vmem:[#allocation4] sm:$0xff] %vm127, %v116
    %129 = vst.msk [vmem:[#allocation4 + $0x28] sm:$0xff] %vm127, %v118
    %130 = vst.msk [vmem:[#allocation4 + $0x50] sm:$0xff] %vm127, %v120
    %131 = vst.msk [vmem:[#allocation4 + $0x78] sm:$0xff] %vm127, %v122
    %v132 = vld [vmem:[#allocation2] sm:$0xff]
    %v133 = vld [vmem:[#allocation2 + $0x8] sm:$0xff]
    %v134 = vld [vmem:[#allocation2 + $0x18] sm:$0xff]
    %v135 = vld [vmem:[#allocation2 + $0x20] sm:$0xff]
    %140 = vrot.lane.b32.xlu0 %v132, 120
    %v141 = vpop.permute.xlu0 %140
    %142 = vrot.lane.b32.xlu0 %v133, 120
    %v143 = vpop.permute.xlu0 %142
    %144 = vrot.lane.b32.xlu0 %v134, 120
    %v145 = vpop.permute.xlu0 %144
    %146 = vrot.lane.b32.xlu0 %v135, 120
    %v147 = vpop.permute.xlu0 %146
    %152 = vst.msk [vmem:[#allocation4 + $0x8] sm:$0xff] %vm102, %v141
    %153 = vst.msk [vmem:[#allocation4 + $0x30] sm:$0xff] %vm102, %v143
    %154 = vst.msk [vmem:[#allocation4 + $0x58] sm:$0xff] %vm102, %v145
    %155 = vst.msk [vmem:[#allocation4 + $0x80] sm:$0xff] %vm102, %v147
    %v156 = vld [vmem:[#allocation2 + $0x1] sm:$0xff]
    %v157 = vld [vmem:[#allocation2 + $0x9] sm:$0xff]
    %v158 = vld [vmem:[#allocation2 + $0x19] sm:$0xff]
    %v159 = vld [vmem:[#allocation2 + $0x21] sm:$0xff]
    %164 = vrot.lane.b32.xlu0 %v156, 64
    %v165 = vpop.permute.xlu0 %164
    %166 = vrot.lane.b32.xlu0 %v157, 64
    %v167 = vpop.permute.xlu0 %166
    %168 = vrot.lane.b32.xlu0 %v158, 64
    %v169 = vpop.permute.xlu0 %168
    %170 = vrot.lane.b32.xlu0 %v159, 64
    %v171 = vpop.permute.xlu0 %170
    %176 = vst.msk [vmem:[#allocation4 + $0x8] sm:$0xff] %vm127, %v165
    %177 = vst.msk [vmem:[#allocation4 + $0x30] sm:$0xff] %vm127, %v167
    %178 = vst.msk [vmem:[#allocation4 + $0x58] sm:$0xff] %vm127, %v169
    %179 = vst.msk [vmem:[#allocation4 + $0x80] sm:$0xff] %vm127, %v171
    %v180 = vld [vmem:[#allocation2 + $0x1] sm:$0xff]
    %v181 = vld [vmem:[#allocation2 + $0x9] sm:$0xff]
    %v182 = vld [vmem:[#allocation2 + $0x19] sm:$0xff]
    %v183 = vld [vmem:[#allocation2 + $0x21] sm:$0xff]
    %188 = vrot.lane.b32.xlu0 %v180, 124
    %v189 = vpop.permute.xlu0 %188
    %190 = vrot.lane.b32.xlu0 %v181, 124
    %v191 = vpop.permute.xlu0 %190
    %192 = vrot.lane.b32.xlu0 %v182, 124
    %v193 = vpop.permute.xlu0 %192
    %194 = vrot.lane.b32.xlu0 %v183, 124
    %v195 = vpop.permute.xlu0 %194
    %200 = vst.msk [vmem:[#allocation4 + $0x10] sm:$0xff] %vm102, %v189
    %201 = vst.msk [vmem:[#allocation4 + $0x38] sm:$0xff] %vm102, %v191
    %202 = vst.msk [vmem:[#allocation4 + $0x60] sm:$0xff] %vm102, %v193
    %203 = vst.msk [vmem:[#allocation4 + $0x88] sm:$0xff] %vm102, %v195
    %v204 = vld [vmem:[#allocation2 + $0x1] sm:$0xff]
    %v205 = vld [vmem:[#allocation2 + $0x9] sm:$0xff]
    %v206 = vld [vmem:[#allocation2 + $0x19] sm:$0xff]
    %v207 = vld [vmem:[#allocation2 + $0x21] sm:$0xff]
    %212 = vrot.lane.b32.xlu0 %v204, 56
    %v213 = vpop.permute.xlu0 %212
    %214 = vrot.lane.b32.xlu0 %v205, 56
    %v215 = vpop.permute.xlu0 %214
    %216 = vrot.lane.b32.xlu0 %v206, 56
    %v217 = vpop.permute.xlu0 %216
    %218 = vrot.lane.b32.xlu0 %v207, 56
    %v219 = vpop.permute.xlu0 %218
    %224 = vst.msk [vmem:[#allocation4 + $0x10] sm:$0xff] %vm127, %v213
    %225 = vst.msk [vmem:[#allocation4 + $0x38] sm:$0xff] %vm127, %v215
    %226 = vst.msk [vmem:[#allocation4 + $0x60] sm:$0xff] %vm127, %v217
    %227 = vst.msk [vmem:[#allocation4 + $0x88] sm:$0xff] %vm127, %v219
    %v228 = vld [vmem:[#allocation2 + $0x2] sm:$0xff]
    %v229 = vld [vmem:[#allocation2 + $0xa] sm:$0xff]
    %v230 = vld [vmem:[#allocation2 + $0x1a] sm:$0xff]
    %v231 = vld [vmem:[#allocation2 + $0x22] sm:$0xff]
    %232 = vst.msk [vmem:[#allocation4 + $0x18] sm:$0xff] %vm102, %v228
    %233 = vst.msk [vmem:[#allocation4 + $0x40] sm:$0xff] %vm102, %v229
    %234 = vst.msk [vmem:[#allocation4 + $0x68] sm:$0xff] %vm102, %v230
    %235 = vst.msk [vmem:[#allocation4 + $0x90] sm:$0xff] %vm102, %v231
    %v236 = vld [vmem:[#allocation2 + $0x2] sm:$0xff]
    %v237 = vld [vmem:[#allocation2 + $0xa] sm:$0xff]
    %v238 = vld [vmem:[#allocation2 + $0x1a] sm:$0xff]
    %v239 = vld [vmem:[#allocation2 + $0x22] sm:$0xff]
    %244 = vrot.lane.b32.xlu0 %v236, 60
    %v245 = vpop.permute.xlu0 %244
    %246 = vrot.lane.b32.xlu0 %v237, 60
    %v247 = vpop.permute.xlu0 %246
    %248 = vrot.lane.b32.xlu0 %v238, 60
    %v249 = vpop.permute.xlu0 %248
    %250 = vrot.lane.b32.xlu0 %v239, 60
    %v251 = vpop.permute.xlu0 %250
    %256 = vst.msk [vmem:[#allocation4 + $0x18] sm:$0xff] %vm127, %v245
    %257 = vst.msk [vmem:[#allocation4 + $0x40] sm:$0xff] %vm127, %v247
    %258 = vst.msk [vmem:[#allocation4 + $0x68] sm:$0xff] %vm127, %v249
    %259 = vst.msk [vmem:[#allocation4 + $0x90] sm:$0xff] %vm127, %v251
    %v260 = vld [vmem:[#allocation2 + $0x2] sm:$0xff]
    %v261 = vld [vmem:[#allocation2 + $0xa] sm:$0xff]
    %v262 = vld [vmem:[#allocation2 + $0x1a] sm:$0xff]
    %v263 = vld [vmem:[#allocation2 + $0x22] sm:$0xff]
    %268 = vrot.lane.b32.xlu0 %v260, 120
    %v269 = vpop.permute.xlu0 %268
    %270 = vrot.lane.b32.xlu0 %v261, 120
    %v271 = vpop.permute.xlu0 %270
    %272 = vrot.lane.b32.xlu0 %v262, 120
    %v273 = vpop.permute.xlu0 %272
    %274 = vrot.lane.b32.xlu0 %v263, 120
    %v275 = vpop.permute.xlu0 %274
    %280 = vst.msk [vmem:[#allocation4 + $0x20] sm:$0xff] %vm102, %v269
    %281 = vst.msk [vmem:[#allocation4 + $0x48] sm:$0xff] %vm102, %v271
    %282 = vst.msk [vmem:[#allocation4 + $0x70] sm:$0xff] %vm102, %v273
    %283 = vst.msk [vmem:[#allocation4 + $0x98] sm:$0xff] %vm102, %v275
    %v284 = vld [vmem:[#allocation4] sm:$0xff]
    %v285 = vld [vmem:[#allocation4 + $0x8] sm:$0xff]
    %v286 = vld [vmem:[#allocation4 + $0x10] sm:$0xff]
    %v287 = vld [vmem:[#allocation4 + $0x18] sm:$0xff]
    %v288 = vld [vmem:[#allocation4 + $0x20] sm:$0xff]
    %v289 = vld [vmem:[#allocation4 + $0x28] sm:$0xff]
    %v290 = vld [vmem:[#allocation4 + $0x30] sm:$0xff]
    %v291 = vld [vmem:[#allocation4 + $0x38] sm:$0xff]
    %v292 = vld [vmem:[#allocation4 + $0x40] sm:$0xff]
    %v293 = vld [vmem:[#allocation4 + $0x48] sm:$0xff]
    %v294 = vld [vmem:[#allocation4 + $0x50] sm:$0xff]
    %v295 = vld [vmem:[#allocation4 + $0x58] sm:$0xff]
    %v296 = vld [vmem:[#allocation4 + $0x60] sm:$0xff]
    %v297 = vld [vmem:[#allocation4 + $0x68] sm:$0xff]
    %v298 = vld [vmem:[#allocation4 + $0x70] sm:$0xff]
    %v299 = vld [vmem:[#allocation4 + $0x78] sm:$0xff]
    %v300 = vld [vmem:[#allocation4 + $0x80] sm:$0xff]
    %v301 = vld [vmem:[#allocation4 + $0x88] sm:$0xff]
    %v302 = vld [vmem:[#allocation4 + $0x90] sm:$0xff]
    %v303 = vld [vmem:[#allocation4 + $0x98] sm:$0xff]
    %v304 = vld [vmem:[#allocation6] sm:$0xff]
    %v305 = vld [vmem:[#allocation6 + $0x8] sm:$0xff]
    %v306 = vld [vmem:[#allocation6 + $0x10] sm:$0xff]
    %v307 = vld [vmem:[#allocation6 + $0x18] sm:$0xff]
    %v308 = vld [vmem:[#allocation6 + $0x20] sm:$0xff]
    %v309 = vld [vmem:[#allocation6 + $0x28] sm:$0xff]
    %v310 = vld [vmem:[#allocation6 + $0x30] sm:$0xff]
    %v311 = vld [vmem:[#allocation6 + $0x38] sm:$0xff]
    %v312 = vld [vmem:[#allocation6 + $0x40] sm:$0xff]
    %v313 = vld [vmem:[#allocation6 + $0x48] sm:$0xff]
    %v314 = vld [vmem:[#allocation6 + $0x50] sm:$0xff]
    %v315 = vld [vmem:[#allocation6 + $0x58] sm:$0xff]
    %v316 = vld [vmem:[#allocation6 + $0x60] sm:$0xff]
    %v317 = vld [vmem:[#allocation6 + $0x68] sm:$0xff]
    %v318 = vld [vmem:[#allocation6 + $0x70] sm:$0xff]
    %v319 = vld [vmem:[#allocation6 + $0x78] sm:$0xff]
    %v320 = vld [vmem:[#allocation6 + $0x80] sm:$0xff]
    %v321 = vld [vmem:[#allocation6 + $0x88] sm:$0xff]
    %v322 = vld [vmem:[#allocation6 + $0x90] sm:$0xff]
    %v323 = vld [vmem:[#allocation6 + $0x98] sm:$0xff]
    %v324 = vld [vmem:[#allocation6 + $0xa0] sm:$0xff]
    %v325 = vld [vmem:[#allocation6 + $0xa8] sm:$0xff]
    %v326 = vld [vmem:[#allocation6 + $0xb0] sm:$0xff]
    %v327 = vld [vmem:[#allocation6 + $0xb8] sm:$0xff]
    %v328 = vld [vmem:[#allocation6 + $0xc0] sm:$0xff]
    %v329 = vld [vmem:[#allocation6 + $0xc8] sm:$0xff]
    %v330 = vld [vmem:[#allocation6 + $0xd0] sm:$0xff]
    %v331 = vld [vmem:[#allocation6 + $0xd8] sm:$0xff]
    %v332 = vld [vmem:[#allocation6 + $0xe0] sm:$0xff]
    %v333 = vld [vmem:[#allocation6 + $0xe8] sm:$0xff]
    %v334 = vld [vmem:[#allocation6 + $0xf0] sm:$0xff]
    %v335 = vld [vmem:[#allocation6 + $0xf8] sm:$0xff]
    %v336 = vld [vmem:[#allocation6 + $0x100] sm:$0xff]
    %v337 = vld [vmem:[#allocation6 + $0x108] sm:$0xff]
    %v338 = vld [vmem:[#allocation6 + $0x110] sm:$0xff]
    %v339 = vld [vmem:[#allocation6 + $0x118] sm:$0xff]
    %v340 = vld [vmem:[#allocation6 + $0x120] sm:$0xff]
    %v341 = vld [vmem:[#allocation6 + $0x128] sm:$0xff]
    %v342 = vld [vmem:[#allocation6 + $0x130] sm:$0xff]
    %v343 = vld [vmem:[#allocation6 + $0x138] sm:$0xff]
    %v344 = vld [vmem:[#allocation6 + $0x140] sm:$0xff]
    %v345 = vld [vmem:[#allocation6 + $0x148] sm:$0xff]
    %v346 = vld [vmem:[#allocation6 + $0x150] sm:$0xff]
    %v347 = vld [vmem:[#allocation6 + $0x158] sm:$0xff]
    %v348 = vld [vmem:[#allocation6 + $0x160] sm:$0xff]
    %v349 = vld [vmem:[#allocation6 + $0x168] sm:$0xff]
    %v350 = vld [vmem:[#allocation6 + $0x170] sm:$0xff]
    %v351 = vld [vmem:[#allocation6 + $0x178] sm:$0xff]
    %v352 = vld [vmem:[#allocation6 + $0x180] sm:$0xff]
    %v353 = vld [vmem:[#allocation6 + $0x188] sm:$0xff]
    %v354 = vld [vmem:[#allocation6 + $0x190] sm:$0xff]
    %v355 = vld [vmem:[#allocation6 + $0x198] sm:$0xff]
    %v356 = vld [vmem:[#allocation6 + $0x1a0] sm:$0xff]
    %v357 = vld [vmem:[#allocation6 + $0x1a8] sm:$0xff]
    %v358 = vld [vmem:[#allocation6 + $0x1b0] sm:$0xff]
    %v359 = vld [vmem:[#allocation6 + $0x1b8] sm:$0xff]
    %v360 = vld [vmem:[#allocation6 + $0x1c0] sm:$0xff]
    %v361 = vld [vmem:[#allocation6 + $0x1c8] sm:$0xff]
    %v362 = vld [vmem:[#allocation6 + $0x1d0] sm:$0xff]
    %v363 = vld [vmem:[#allocation6 + $0x1d8] sm:$0xff]
    %v364 = vld [vmem:[#allocation6 + $0x1e0] sm:$0xff]
    %v365 = vld [vmem:[#allocation6 + $0x1e8] sm:$0xff]
    %v366 = vld [vmem:[#allocation6 + $0x1f0] sm:$0xff]
    %v367 = vld [vmem:[#allocation6 + $0x1f8] sm:$0xff]
    %v368 = vld [vmem:[#allocation6 + $0x200] sm:$0xff]
    %v369 = vld [vmem:[#allocation6 + $0x208] sm:$0xff]
    %v370 = vld [vmem:[#allocation6 + $0x210] sm:$0xff]
    %v371 = vld [vmem:[#allocation6 + $0x218] sm:$0xff]
    %v372 = vld [vmem:[#allocation6 + $0x220] sm:$0xff]
    %v373 = vld [vmem:[#allocation6 + $0x228] sm:$0xff]
    %v374 = vld [vmem:[#allocation6 + $0x230] sm:$0xff]
    %v375 = vld [vmem:[#allocation6 + $0x238] sm:$0xff]
    %v376 = vld [vmem:[%s2] sm:$0x1]
    %v378 = vperm.slane %v376, 0
    %v381 = vsel %vm102, %v288, 0
    %v384 = vsel %vm102, %v293, 0
    %v387 = vsel %vm102, %v298, 0
    %v390 = vsel %vm102, %v303, 0
    %392 = vmatpush.msra.mxu0 %v319
    %393 = vmatpush.msra.mxu0 %v318
    %394 = vmatpush.msra.mxu0 %v317
    %395 = vmatpush.msra.mxu0 %v316
    %396 = vmatpush.msra.mxu0 %v315
    %397 = vmatpush.msra.mxu0 %v314
    %398 = vmatpush.msra.mxu0 %v313
    %399 = vmatpush.msra.mxu0 %v312
    %400 = vmatpush.msra.mxu0 %v311
    %401 = vmatpush.msra.mxu0 %v310
    %402 = vmatpush.msra.mxu0 %v309
    %403 = vmatpush.msra.mxu0 %v308
    %404 = vmatpush.msra.mxu0 %v307
    %405 = vmatpush.msra.mxu0 %v306
    %406 = vmatpush.msra.mxu0 %v305
    %407 = vmatpush.msra.mxu0 %v304
    %408 = vmatmul.f32.gmra.mxu0 %v284
    %v409 = vpop.f32.mrf.mxu0
    %v410 = vadd.f32 %v378, %v409
    %411 = vmatmul.f32.gmra.mxu0 %v289
    %v412 = vpop.f32.mrf.mxu0
    %v413 = vadd.f32 %v378, %v412
    %414 = vmatmul.f32.gmra.mxu0 %v294
    %v415 = vpop.f32.mrf.mxu0
    %v416 = vadd.f32 %v378, %v415
    %417 = vmatmul.f32.gmra.mxu0 %v299
    %v418 = vpop.f32.mrf.mxu0
    %v419 = vadd.f32 %v378, %v418
    %420 = vdwg.mxu0
    %421 = vmatpush.msra.mxu0 %v335
    %422 = vmatpush.msra.mxu0 %v334
    %423 = vmatpush.msra.mxu0 %v333
    %424 = vmatpush.msra.mxu0 %v332
    %425 = vmatpush.msra.mxu0 %v331
    %426 = vmatpush.msra.mxu0 %v330
    %427 = vmatpush.msra.mxu0 %v329
    %428 = vmatpush.msra.mxu0 %v328
    %429 = vmatpush.msra.mxu0 %v327
    %430 = vmatpush.msra.mxu0 %v326
    %431 = vmatpush.msra.mxu0 %v325
    %432 = vmatpush.msra.mxu0 %v324
    %433 = vmatpush.msra.mxu0 %v323
    %434 = vmatpush.msra.mxu0 %v322
    %435 = vmatpush.msra.mxu0 %v321
    %436 = vmatpush.msra.mxu0 %v320
    %437 = vmatmul.f32.gmra.mxu0 %v285
    %v438 = vpop.f32.mrf.mxu0
    %v439 = vadd.f32 %v410, %v438
    %440 = vmatmul.f32.gmra.mxu0 %v290
    %v441 = vpop.f32.mrf.mxu0
    %v442 = vadd.f32 %v413, %v441
    %443 = vmatmul.f32.gmra.mxu0 %v295
    %v444 = vpop.f32.mrf.mxu0
    %v445 = vadd.f32 %v416, %v444
    %446 = vmatmul.f32.gmra.mxu0 %v300
    %v447 = vpop.f32.mrf.mxu0
    %v448 = vadd.f32 %v419, %v447
    %449 = vdwg.mxu0
    %450 = vmatpush.msra.mxu0 %v351
    %451 = vmatpush.msra.mxu0 %v350
    %452 = vmatpush.msra.mxu0 %v349
    %453 = vmatpush.msra.mxu0 %v348
    %454 = vmatpush.msra.mxu0 %v347
    %455 = vmatpush.msra.mxu0 %v346
    %456 = vmatpush.msra.mxu0 %v345
    %457 = vmatpush.msra.mxu0 %v344
    %458 = vmatpush.msra.mxu0 %v343
    %459 = vmatpush.msra.mxu0 %v342
    %460 = vmatpush.msra.mxu0 %v341
    %461 = vmatpush.msra.mxu0 %v340
    %462 = vmatpush.msra.mxu0 %v339
    %463 = vmatpush.msra.mxu0 %v338
    %464 = vmatpush.msra.mxu0 %v337
    %465 = vmatpush.msra.mxu0 %v336
    %466 = vmatmul.f32.gmra.mxu0 %v286
    %v467 = vpop.f32.mrf.mxu0
    %v468 = vadd.f32 %v439, %v467
    %469 = vmatmul.f32.gmra.mxu0 %v291
    %v470 = vpop.f32.mrf.mxu0
    %v471 = vadd.f32 %v442, %v470
    %472 = vmatmul.f32.gmra.mxu0 %v296
    %v473 = vpop.f32.mrf.mxu0
    %v474 = vadd.f32 %v445, %v473
    %475 = vmatmul.f32.gmra.mxu0 %v301
    %v476 = vpop.f32.mrf.mxu0
    %v477 = vadd.f32 %v448, %v476
    %478 = vdwg.mxu0
    %479 = vmatpush.msra.mxu0 %v367
    %480 = vmatpush.msra.mxu0 %v366
    %481 = vmatpush.msra.mxu0 %v365
    %482 = vmatpush.msra.mxu0 %v364
    %483 = vmatpush.msra.mxu0 %v363
    %484 = vmatpush.msra.mxu0 %v362
    %485 = vmatpush.msra.mxu0 %v361
    %486 = vmatpush.msra.mxu0 %v360
    %487 = vmatpush.msra.mxu0 %v359
    %488 = vmatpush.msra.mxu0 %v358
    %489 = vmatpush.msra.mxu0 %v357
    %490 = vmatpush.msra.mxu0 %v356
    %491 = vmatpush.msra.mxu0 %v355
    %492 = vmatpush.msra.mxu0 %v354
    %493 = vmatpush.msra.mxu0 %v353
    %494 = vmatpush.msra.mxu0 %v352
    %495 = vmatmul.f32.gmra.mxu0 %v287
    %v496 = vpop.f32.mrf.mxu0
    %v497 = vadd.f32 %v468, %v496
    %498 = vmatmul.f32.gmra.mxu0 %v292
    %v499 = vpop.f32.mrf.mxu0
    %v500 = vadd.f32 %v471, %v499
    %501 = vmatmul.f32.gmra.mxu0 %v297
    %v502 = vpop.f32.mrf.mxu0
    %v503 = vadd.f32 %v474, %v502
    %504 = vmatmul.f32.gmra.mxu0 %v302
    %v505 = vpop.f32.mrf.mxu0
    %v506 = vadd.f32 %v477, %v505
    %507 = vdwg.mxu0
    %508 = vmatpush.msra.mxu0 0.0
    %509 = vmatpush.msra.mxu0 0.0
    %510 = vmatpush.msra.mxu0 0.0
    %511 = vmatpush.msra.mxu0 0.0
    %512 = vmatpush.msra.mxu0 0.0
    %513 = vmatpush.msra.mxu0 0.0
    %514 = vmatpush.msra.mxu0 0.0
    %515 = vmatpush.msra.mxu0 0.0
    %516 = vmatpush.msra.mxu0 %v375
    %517 = vmatpush.msra.mxu0 %v374
    %518 = vmatpush.msra.mxu0 %v373
    %519 = vmatpush.msra.mxu0 %v372
    %520 = vmatpush.msra.mxu0 %v371
    %521 = vmatpush.msra.mxu0 %v370
    %522 = vmatpush.msra.mxu0 %v369
    %523 = vmatpush.msra.mxu0 %v368
    %524 = vmatmul.f32.gmra.mxu0 %v381
    %v525 = vpop.f32.mrf.mxu0
    %v526 = vadd.f32 %v497, %v525
    %527 = vmatmul.f32.gmra.mxu0 %v384
    %v528 = vpop.f32.mrf.mxu0
    %v529 = vadd.f32 %v500, %v528
    %530 = vmatmul.f32.gmra.mxu0 %v387
    %v531 = vpop.f32.mrf.mxu0
    %v532 = vadd.f32 %v503, %v531
    %533 = vmatmul.f32.gmra.mxu0 %v390
    %v534 = vpop.f32.mrf.mxu0
    %v535 = vadd.f32 %v506, %v534
    %536 = vdwg.mxu0
    %v537 = vmax.f32 %v526, 0.0
    %v538 = vmax.f32 %v529, 0.0
    %v539 = vmax.f32 %v532, 0.0
    %v540 = vmax.f32 %v535, 0.0
    %v541 = vlaneseq
    %vm542 = vcmp.ge.s32.totalorder %v541, 0
    %vm543 = vcmp.lt.s32.totalorder %v541, 144
    %vm544 = vmand %vm542, %vm543
    %545 = vst.msk [vmem:[#allocation3] ss:$8 sm:$0x3] %vm544, 0.0
    %546 = vst.msk [vmem:[#allocation3] ss:$8 sm:$0x0] %vm544, 0.0
    %s547 = scalar_lea.vmem [#allocation3], 48
    %548 = vst.msk [vmem:[%s547] ss:$8 sm:$0x3] %vm544, 0.0
    %549 = vst.msk [vmem:[%s547] ss:$8 sm:$0x0] %vm544, 0.0
    %s550 = scalar_lea.vmem [#allocation3], 33
    %551 = vst.msk [vmem:[%s550] ss:$8 sm:$0x3] %vm544, 0.0
    %552 = vst.msk [vmem:[%s550] ss:$8 sm:$0x0] %vm544, 0.0
    %s553 = scalar_lea.vmem [#allocation3], 81
    %554 = vst.msk [vmem:[%s553] ss:$8 sm:$0x3] %vm544, 0.0
    %555 = vst.msk [vmem:[%s553] ss:$8 sm:$0x0] %vm544, 0.0
    %vm556 = vcmask 64512
    %557 = vst.msk [vmem:[#allocation3] sm:$0xff] %vm556, 0.0
    %558 = vst.msk [vmem:[#allocation3 + $0x10] sm:$0xff] %vm556, 0.0
    %vm559 = vcmask 58368
    %560 = vst.msk [vmem:[#allocation3 + $0x20] sm:$0x3] %vm559, 0.0
    %561 = vst.msk [vmem:[#allocation3 + $0x30] sm:$0xff] %vm556, 0.0
    %562 = vst.msk [vmem:[#allocation3 + $0x40] sm:$0xff] %vm556, 0.0
    %563 = vst.msk [vmem:[#allocation3 + $0x50] sm:$0x3] %vm559, 0.0
    %vm564 = vcmask 130112
    %565 = vst.msk [vmem:[#allocation3 + $0x8] sm:$0xff] %vm564, 0.0
    %566 = vst.msk [vmem:[#allocation3 + $0x18] sm:$0xff] %vm564, 0.0
    %vm567 = vcmask 123968
    %568 = vst.msk [vmem:[#allocation3 + $0x28] sm:$0x3] %vm567, 0.0
    %569 = vst.msk [vmem:[#allocation3 + $0x38] sm:$0xff] %vm564, 0.0
    %570 = vst.msk [vmem:[#allocation3 + $0x48] sm:$0xff] %vm564, 0.0
    %571 = vst.msk [vmem:[#allocation3 + $0x58] sm:$0x3] %vm567, 0.0
    %vm576 = vcmask 1040384
    %v577 = vrot.slane %v537, 7
    %v578 = vrot.slane %v538, 7
    %v579 = vsel %vm576, %v577, %v578
    %v580 = vrot.slane %v539, 7
    %v581 = vrot.slane %v540, 7
    %v582 = vsel %vm576, %v580, %v581
    %583 = vrot.lane.b32.xlu0 %v577, 8
    %v584 = vpop.permute.xlu0 %583
    %585 = vrot.lane.b32.xlu0 %v579, 8
    %v586 = vpop.permute.xlu0 %585
    %587 = vrot.lane.b32.xlu0 %v578, 8
    %v588 = vpop.permute.xlu0 %587
    %589 = vrot.lane.b32.xlu0 %v580, 8
    %v590 = vpop.permute.xlu0 %589
    %591 = vrot.lane.b32.xlu0 %v582, 8
    %v592 = vpop.permute.xlu0 %591
    %593 = vrot.lane.b32.xlu0 %v581, 8
    %v594 = vpop.permute.xlu0 %593
    %vm601 = vcmask 1047617
    %602 = vst.msk [vmem:[#allocation3] sm:$0xfe] %vm601, %v584
    %vm603 = vcmask 64513
    %604 = vst.msk [vmem:[#allocation3 + $0x8] sm:$0xfe] %vm603, %v584
    %vm605 = vcmask 1047616
    %606 = vst.msk [vmem:[#allocation3 + $0x10] sm:$0xff] %vm605, %v586
    %607 = vst.msk [vmem:[#allocation3 + $0x18] sm:$0xff] %vm556, %v586
    %vm608 = vcmask 1040448
    %609 = vst.msk [vmem:[#allocation3 + $0x20] sm:$0x1] %vm608, %v588
    %vm610 = vcmask 57344
    %611 = vst.msk [vmem:[#allocation3 + $0x28] sm:$0x1] %vm610, %v588
    %612 = vst.msk [vmem:[#allocation3 + $0x30] sm:$0xfe] %vm601, %v590
    %613 = vst.msk [vmem:[#allocation3 + $0x38] sm:$0xfe] %vm603, %v590
    %614 = vst.msk [vmem:[#allocation3 + $0x40] sm:$0xff] %vm605, %v592
    %615 = vst.msk [vmem:[#allocation3 + $0x48] sm:$0xff] %vm556, %v592
    %616 = vst.msk [vmem:[#allocation3 + $0x50] sm:$0x1] %vm608, %v594
    %617 = vst.msk [vmem:[#allocation3 + $0x58] sm:$0x1] %vm610, %v594
    %v618 = vld [vmem:[#allocation3] sm:$0xff]
    %v619 = vld [vmem:[#allocation3 + $0x10] sm:$0xff]
    %v620 = vld [vmem:[#allocation3 + $0x30] sm:$0xff]
    %v621 = vld [vmem:[#allocation3 + $0x40] sm:$0xff]
    %622 = vst [vmem:[#allocation5] sm:$0xff] %v618
    %623 = vst [vmem:[#allocation5 + $0x48] sm:$0xff] %v619
    %624 = vst [vmem:[#allocation5 + $0x90] sm:$0xff] %v620
    %625 = vst [vmem:[#allocation5 + $0xd8] sm:$0xff] %v621
    %v626 = vld [vmem:[#allocation3] sm:$0xff]
    %v627 = vld [vmem:[#allocation3 + $0x8] sm:$0xff]
    %v628 = vld [vmem:[#allocation3 + $0x10] sm:$0xff]
    %v629 = vld [vmem:[#allocation3 + $0x18] sm:$0xff]
    %v630 = vld [vmem:[#allocation3 + $0x30] sm:$0xff]
    %v631 = vld [vmem:[#allocation3 + $0x38] sm:$0xff]
    %v632 = vld [vmem:[#allocation3 + $0x40] sm:$0xff]
    %v633 = vld [vmem:[#allocation3 + $0x48] sm:$0xff]
    %642 = vrot.lane.b32.xlu0 %v626, 120
    %v643 = vpop.permute.xlu0 %642
    %644 = vrot.lane.b32.xlu0 %v627, 120
    %v645 = vpop.permute.xlu0 %644
    %646 = vrot.lane.b32.xlu0 %v628, 120
    %v647 = vpop.permute.xlu0 %646
    %648 = vrot.lane.b32.xlu0 %v629, 120
    %v649 = vpop.permute.xlu0 %648
    %650 = vrot.lane.b32.xlu0 %v630, 120
    %v651 = vpop.permute.xlu0 %650
    %652 = vrot.lane.b32.xlu0 %v631, 120
    %v653 = vpop.permute.xlu0 %652
    %654 = vrot.lane.b32.xlu0 %v632, 120
    %v655 = vpop.permute.xlu0 %654
    %656 = vrot.lane.b32.xlu0 %v633, 120
    %v657 = vpop.permute.xlu0 %656
    %vm658 = vcmask 982016
    %v659 = vsel %vm658, %v643, %v645
    %v660 = vsel %vm658, %v647, %v649
    %v661 = vsel %vm658, %v651, %v653
    %v662 = vsel %vm658, %v655, %v657
    %667 = vst [vmem:[#allocation5 + $0x8] sm:$0xff] %v659
    %668 = vst [vmem:[#allocation5 + $0x50] sm:$0xff] %v660
    %669 = vst [vmem:[#allocation5 + $0x98] sm:$0xff] %v661
    %670 = vst [vmem:[#allocation5 + $0xe0] sm:$0xff] %v662
    %v671 = vld [vmem:[#allocation3] sm:$0xff]
    %v672 = vld [vmem:[#allocation3 + $0x8] sm:$0xff]
    %v673 = vld [vmem:[#allocation3 + $0x10] sm:$0xff]
    %v674 = vld [vmem:[#allocation3 + $0x18] sm:$0xff]
    %v675 = vld [vmem:[#allocation3 + $0x30] sm:$0xff]
    %v676 = vld [vmem:[#allocation3 + $0x38] sm:$0xff]
    %v677 = vld [vmem:[#allocation3 + $0x40] sm:$0xff]
    %v678 = vld [vmem:[#allocation3 + $0x48] sm:$0xff]
    %687 = vrot.lane.b32.xlu0 %v671, 112
    %v688 = vpop.permute.xlu0 %687
    %689 = vrot.lane.b32.xlu0 %v672, 112
    %v690 = vpop.permute.xlu0 %689
    %691 = vrot.lane.b32.xlu0 %v673, 112
    %v692 = vpop.permute.xlu0 %691
    %693 = vrot.lane.b32.xlu0 %v674, 112
    %v694 = vpop.permute.xlu0 %693
    %695 = vrot.lane.b32.xlu0 %v675, 112
    %v696 = vpop.permute.xlu0 %695
    %697 = vrot.lane.b32.xlu0 %v676, 112
    %v698 = vpop.permute.xlu0 %697
    %699 = vrot.lane.b32.xlu0 %v677, 112
    %v700 = vpop.permute.xlu0 %699
    %701 = vrot.lane.b32.xlu0 %v678, 112
    %v702 = vpop.permute.xlu0 %701
    %vm703 = vcmask 916480
    %v704 = vsel %vm703, %v688, %v690
    %v705 = vsel %vm703, %v692, %v694
    %v706 = vsel %vm703, %v696, %v698
    %v707 = vsel %vm703, %v700, %v702
    %712 = vst [vmem:[#allocation5 + $0x10] sm:$0xff] %v704
    %713 = vst [vmem:[#allocation5 + $0x58] sm:$0xff] %v705
    %714 = vst [vmem:[#allocation5 + $0xa0] sm:$0xff] %v706
    %715 = vst [vmem:[#allocation5 + $0xe8] sm:$0xff] %v707
    %v716 = vld [vmem:[#allocation3] sm:$0xfe]
    %v717 = vld [vmem:[#allocation3 + $0x10] sm:$0xff]
    %v718 = vld [vmem:[#allocation3 + $0x20] sm:$0x1]
    %v719 = vld [vmem:[#allocation3 + $0x30] sm:$0xfe]
    %v720 = vld [vmem:[#allocation3 + $0x40] sm:$0xff]
    %v721 = vld [vmem:[#allocation3 + $0x50] sm:$0x1]
    %vm728 = vcmask 1046528
    %v729 = vrot.slane %v716, 1
    %v730 = vrot.slane %v717, 1
    %v731 = vsel %vm728, %v729, %v730
    %v732 = vrot.slane %v718, 1
    %v733 = vsel %vm728, %v730, %v732
    %v734 = vrot.slane %v719, 1
    %v735 = vrot.slane %v720, 1
    %v736 = vsel %vm728, %v734, %v735
    %v737 = vrot.slane %v721, 1
    %v738 = vsel %vm728, %v735, %v737
    %743 = vst [vmem:[#allocation5 + $0x18] sm:$0xff] %v731
    %744 = vst [vmem:[#allocation5 + $0x60] sm:$0xff] %v733
    %745 = vst [vmem:[#allocation5 + $0xa8] sm:$0xff] %v736
    %746 = vst [vmem:[#allocation5 + $0xf0] sm:$0xff] %v738
    %v747 = vld [vmem:[#allocation3] sm:$0xfe]
    %v748 = vld [vmem:[#allocation3 + $0x8] sm:$0xfe]
    %v749 = vld [vmem:[#allocation3 + $0x10] sm:$0xff]
    %v750 = vld [vmem:[#allocation3 + $0x18] sm:$0xff]
    %v751 = vld [vmem:[#allocation3 + $0x20] sm:$0x1]
    %v752 = vld [vmem:[#allocation3 + $0x28] sm:$0x1]
    %v753 = vld [vmem:[#allocation3 + $0x30] sm:$0xfe]
    %v754 = vld [vmem:[#allocation3 + $0x38] sm:$0xfe]
    %v755 = vld [vmem:[#allocation3 + $0x40] sm:$0xff]
    %v756 = vld [vmem:[#allocation3 + $0x48] sm:$0xff]
    %v757 = vld [vmem:[#allocation3 + $0x50] sm:$0x1]
    %v758 = vld [vmem:[#allocation3 + $0x58] sm:$0x1]
    %v771 = vrot.slane %v747, 1
    %v772 = vrot.slane %v749, 1
    %v773 = vsel %vm728, %v771, %v772
    %v774 = vrot.slane %v748, 1
    %v775 = vrot.slane %v750, 1
    %v776 = vsel %vm728, %v774, %v775
    %v777 = vrot.slane %v751, 1
    %v778 = vsel %vm728, %v772, %v777
    %v779 = vrot.slane %v752, 1
    %v780 = vsel %vm728, %v775, %v779
    %v781 = vrot.slane %v753, 1
    %v782 = vrot.slane %v755, 1
    %v783 = vsel %vm728, %v781, %v782
    %v784 = vrot.slane %v754, 1
    %v785 = vrot.slane %v756, 1
    %v786 = vsel %vm728, %v784, %v785
    %v787 = vrot.slane %v757, 1
    %v788 = vsel %vm728, %v782, %v787
    %v789 = vrot.slane %v758, 1
    %v790 = vsel %vm728, %v785, %v789
    %791 = vrot.lane.b32.xlu0 %v773, 120
    %v792 = vpop.permute.xlu0 %791
    %793 = vrot.lane.b32.xlu0 %v776, 120
    %v794 = vpop.permute.xlu0 %793
    %795 = vrot.lane.b32.xlu0 %v778, 120
    %v796 = vpop.permute.xlu0 %795
    %797 = vrot.lane.b32.xlu0 %v780, 120
    %v798 = vpop.permute.xlu0 %797
    %799 = vrot.lane.b32.xlu0 %v783, 120
    %v800 = vpop.permute.xlu0 %799
    %801 = vrot.lane.b32.xlu0 %v786, 120
    %v802 = vpop.permute.xlu0 %801
    %803 = vrot.lane.b32.xlu0 %v788, 120
    %v804 = vpop.permute.xlu0 %803
    %805 = vrot.lane.b32.xlu0 %v790, 120
    %v806 = vpop.permute.xlu0 %805
    %v807 = vsel %vm658, %v792, %v794
    %v808 = vsel %vm658, %v796, %v798
    %v809 = vsel %vm658, %v800, %v802
    %v810 = vsel %vm658, %v804, %v806
    %815 = vst [vmem:[#allocation5 + $0x20] sm:$0xff] %v807
    %816 = vst [vmem:[#allocation5 + $0x68] sm:$0xff] %v808
    %817 = vst [vmem:[#allocation5 + $0xb0] sm:$0xff] %v809
    %818 = vst [vmem:[#allocation5 + $0xf8] sm:$0xff] %v810
    %v819 = vld [vmem:[#allocation3] sm:$0xfe]
    %v820 = vld [vmem:[#allocation3 + $0x8] sm:$0xfe]
    %v821 = vld [vmem:[#allocation3 + $0x10] sm:$0xff]
    %v822 = vld [vmem:[#allocation3 + $0x18] sm:$0xff]
    %v823 = vld [vmem:[#allocation3 + $0x20] sm:$0x1]
    %v824 = vld [vmem:[#allocation3 + $0x28] sm:$0x1]
    %v825 = vld [vmem:[#allocation3 + $0x30] sm:$0xfe]
    %v826 = vld [vmem:[#allocation3 + $0x38] sm:$0xfe]
    %v827 = vld [vmem:[#allocation3 + $0x40] sm:$0xff]
    %v828 = vld [vmem:[#allocation3 + $0x48] sm:$0xff]
    %v829 = vld [vmem:[#allocation3 + $0x50] sm:$0x1]
    %v830 = vld [vmem:[#allocation3 + $0x58] sm:$0x1]
    %v843 = vrot.slane %v819, 1
    %v844 = vrot.slane %v821, 1
    %v845 = vsel %vm728, %v843, %v844
    %v846 = vrot.slane %v820, 1
    %v847 = vrot.slane %v822, 1
    %v848 = vsel %vm728, %v846, %v847
    %v849 = vrot.slane %v823, 1
    %v850 = vsel %vm728, %v844, %v849
    %v851 = vrot.slane %v824, 1
    %v852 = vsel %vm728, %v847, %v851
    %v853 = vrot.slane %v825, 1
    %v854 = vrot.slane %v827, 1
    %v855 = vsel %vm728, %v853, %v854
    %v856 = vrot.slane %v826, 1
    %v857 = vrot.slane %v828, 1
    %v858 = vsel %vm728, %v856, %v857
    %v859 = vrot.slane %v829, 1
    %v860 = vsel %vm728, %v854, %v859
    %v861 = vrot.slane %v830, 1
    %v862 = vsel %vm728, %v857, %v861
    %863 = vrot.lane.b32.xlu0 %v845, 112
    %v864 = vpop.permute.xlu0 %863
    %865 = vrot.lane.b32.xlu0 %v848, 112
    %v866 = vpop.permute.xlu0 %865
    %867 = vrot.lane.b32.xlu0 %v850, 112
    %v868 = vpop.permute.xlu0 %867
    %869 = vrot.lane.b32.xlu0 %v852, 112
    %v870 = vpop.permute.xlu0 %869
    %871 = vrot.lane.b32.xlu0 %v855, 112
    %v872 = vpop.permute.xlu0 %871
    %873 = vrot.lane.b32.xlu0 %v858, 112
    %v874 = vpop.permute.xlu0 %873
    %875 = vrot.lane.b32.xlu0 %v860, 112
    %v876 = vpop.permute.xlu0 %875
    %877 = vrot.lane.b32.xlu0 %v862, 112
    %v878 = vpop.permute.xlu0 %877
    %v879 = vsel %vm703, %v864, %v866
    %v880 = vsel %vm703, %v868, %v870
    %v881 = vsel %vm703, %v872, %v874
    %v882 = vsel %vm703, %v876, %v878
    %887 = vst [vmem:[#allocation5 + $0x28] sm:$0xff] %v879
    %888 = vst [vmem:[#allocation5 + $0x70] sm:$0xff] %v880
    %889 = vst [vmem:[#allocation5 + $0xb8] sm:$0xff] %v881
    %890 = vst [vmem:[#allocation5 + $0x100] sm:$0xff] %v882
    %v891 = vld [vmem:[#allocation3] sm:$0xfc]
    %v892 = vld [vmem:[#allocation3 + $0x10] sm:$0xff]
    %v893 = vld [vmem:[#allocation3 + $0x20] sm:$0x3]
    %v894 = vld [vmem:[#allocation3 + $0x30] sm:$0xfc]
    %v895 = vld [vmem:[#allocation3 + $0x40] sm:$0xff]
    %v896 = vld [vmem:[#allocation3 + $0x50] sm:$0x3]
    %vm903 = vcmask 1045504
    %v904 = vrot.slane %v891, 2
    %v905 = vrot.slane %v892, 2
    %v906 = vsel %vm903, %v904, %v905
    %v907 = vrot.slane %v893, 2
    %v908 = vsel %vm903, %v905, %v907
    %v909 = vrot.slane %v894, 2
    %v910 = vrot.slane %v895, 2
    %v911 = vsel %vm903, %v909, %v910
    %v912 = vrot.slane %v896, 2
    %v913 = vsel %vm903, %v910, %v912
    %918 = vst [vmem:[#allocation5 + $0x30] sm:$0xff] %v906
    %919 = vst [vmem:[#allocation5 + $0x78] sm:$0xff] %v908
    %920 = vst [vmem:[#allocation5 + $0xc0] sm:$0xff] %v911
    %921 = vst [vmem:[#allocation5 + $0x108] sm:$0xff] %v913
    %v922 = vld [vmem:[#allocation3] sm:$0xfc]
    %v923 = vld [vmem:[#allocation3 + $0x8] sm:$0xfc]
    %v924 = vld [vmem:[#allocation3 + $0x10] sm:$0xff]
    %v925 = vld [vmem:[#allocation3 + $0x18] sm:$0xff]
    %v926 = vld [vmem:[#allocation3 + $0x20] sm:$0x3]
    %v927 = vld [vmem:[#allocation3 + $0x28] sm:$0x3]
    %v928 = vld [vmem:[#allocation3 + $0x30] sm:$0xfc]
    %v929 = vld [vmem:[#allocation3 + $0x38] sm:$0xfc]
    %v930 = vld [vmem:[#allocation3 + $0x40] sm:$0xff]
    %v931 = vld [vmem:[#allocation3 + $0x48] sm:$0xff]
    %v932 = vld [vmem:[#allocation3 + $0x50] sm:$0x3]
    %v933 = vld [vmem:[#allocation3 + $0x58] sm:$0x3]
    %v946 = vrot.slane %v922, 2
    %v947 = vrot.slane %v924, 2
    %v948 = vsel %vm903, %v946, %v947
    %v949 = vrot.slane %v923, 2
    %v950 = vrot.slane %v925, 2
    %v951 = vsel %vm903, %v949, %v950
    %v952 = vrot.slane %v926, 2
    %v953 = vsel %vm903, %v947, %v952
    %v954 = vrot.slane %v927, 2
    %v955 = vsel %vm903, %v950, %v954
    %v956 = vrot.slane %v928, 2
    %v957 = vrot.slane %v930, 2
    %v958 = vsel %vm903, %v956, %v957
    %v959 = vrot.slane %v929, 2
    %v960 = vrot.slane %v931, 2
    %v961 = vsel %vm903, %v959, %v960
    %v962 = vrot.slane %v932, 2
    %v963 = vsel %vm903, %v957, %v962
    %v964 = vrot.slane %v933, 2
    %v965 = vsel %vm903, %v960, %v964
    %966 = vrot.lane.b32.xlu0 %v948, 120
    %v967 = vpop.permute.xlu0 %966
    %968 = vrot.lane.b32.xlu0 %v951, 120
    %v969 = vpop.permute.xlu0 %968
    %970 = vrot.lane.b32.xlu0 %v953, 120
    %v971 = vpop.permute.xlu0 %970
    %972 = vrot.lane.b32.xlu0 %v955, 120
    %v973 = vpop.permute.xlu0 %972
    %974 = vrot.lane.b32.xlu0 %v958, 120
    %v975 = vpop.permute.xlu0 %974
    %976 = vrot.lane.b32.xlu0 %v961, 120
    %v977 = vpop.permute.xlu0 %976
    %978 = vrot.lane.b32.xlu0 %v963, 120
    %v979 = vpop.permute.xlu0 %978
    %980 = vrot.lane.b32.xlu0 %v965, 120
    %v981 = vpop.permute.xlu0 %980
    %v982 = vsel %vm658, %v967, %v969
    %v983 = vsel %vm658, %v971, %v973
    %v984 = vsel %vm658, %v975, %v977
    %v985 = vsel %vm658, %v979, %v981
    %990 = vst [vmem:[#allocation5 + $0x38] sm:$0xff] %v982
    %991 = vst [vmem:[#allocation5 + $0x80] sm:$0xff] %v983
    %992 = vst [vmem:[#allocation5 + $0xc8] sm:$0xff] %v984
    %993 = vst [vmem:[#allocation5 + $0x110] sm:$0xff] %v985
    %v994 = vld [vmem:[#allocation3] sm:$0xfc]
    %v995 = vld [vmem:[#allocation3 + $0x8] sm:$0xfc]
    %v996 = vld [vmem:[#allocation3 + $0x10] sm:$0xff]
    %v997 = vld [vmem:[#allocation3 + $0x18] sm:$0xff]
    %v998 = vld [vmem:[#allocation3 + $0x20] sm:$0x3]
    %v999 = vld [vmem:[#allocation3 + $0x28] sm:$0x3]
    %v1000 = vld [vmem:[#allocation3 + $0x30] sm:$0xfc]
    %v1001 = vld [vmem:[#allocation3 + $0x38] sm:$0xfc]
    %v1002 = vld [vmem:[#allocation3 + $0x40] sm:$0xff]
    %v1003 = vld [vmem:[#allocation3 + $0x48] sm:$0xff]
    %v1004 = vld [vmem:[#allocation3 + $0x50] sm:$0x3]
    %v1005 = vld [vmem:[#allocation3 + $0x58] sm:$0x3]
    %v1018 = vrot.slane %v994, 2
    %v1019 = vrot.slane %v996, 2
    %v1020 = vsel %vm903, %v1018, %v1019
    %v1021 = vrot.slane %v995, 2
    %v1022 = vrot.slane %v997, 2
    %v1023 = vsel %vm903, %v1021, %v1022
    %v1024 = vrot.slane %v998, 2
    %v1025 = vsel %vm903, %v1019, %v1024
    %v1026 = vrot.slane %v999, 2
    %v1027 = vsel %vm903, %v1022, %v1026
    %v1028 = vrot.slane %v1000, 2
    %v1029 = vrot.slane %v1002, 2
    %v1030 = vsel %vm903, %v1028, %v1029
    %v1031 = vrot.slane %v1001, 2
    %v1032 = vrot.slane %v1003, 2
    %v1033 = vsel %vm903, %v1031, %v1032
    %v1034 = vrot.slane %v1004, 2
    %v1035 = vsel %vm903, %v1029, %v1034
    %v1036 = vrot.slane %v1005, 2
    %v1037 = vsel %vm903, %v1032, %v1036
    %1038 = vrot.lane.b32.xlu0 %v1020, 112
    %v1039 = vpop.permute.xlu0 %1038
    %1040 = vrot.lane.b32.xlu0 %v1023, 112
    %v1041 = vpop.permute.xlu0 %1040
    %1042 = vrot.lane.b32.xlu0 %v1025, 112
    %v1043 = vpop.permute.xlu0 %1042
    %1044 = vrot.lane.b32.xlu0 %v1027, 112
    %v1045 = vpop.permute.xlu0 %1044
    %1046 = vrot.lane.b32.xlu0 %v1030, 112
    %v1047 = vpop.permute.xlu0 %1046
    %1048 = vrot.lane.b32.xlu0 %v1033, 112
    %v1049 = vpop.permute.xlu0 %1048
    %1050 = vrot.lane.b32.xlu0 %v1035, 112
    %v1051 = vpop.permute.xlu0 %1050
    %1052 = vrot.lane.b32.xlu0 %v1037, 112
    %v1053 = vpop.permute.xlu0 %1052
    %v1054 = vsel %vm703, %v1039, %v1041
    %v1055 = vsel %vm703, %v1043, %v1045
    %v1056 = vsel %vm703, %v1047, %v1049
    %v1057 = vsel %vm703, %v1051, %v1053
    %1062 = vst [vmem:[#allocation5 + $0x40] sm:$0xff] %v1054
    %1063 = vst [vmem:[#allocation5 + $0x88] sm:$0xff] %v1055
    %1064 = vst [vmem:[#allocation5 + $0xd0] sm:$0xff] %v1056
    %1065 = vst [vmem:[#allocation5 + $0x118] sm:$0xff] %v1057
    %v1066 = vld [vmem:[#allocation5] sm:$0xff]
    %v1067 = vld [vmem:[#allocation5 + $0x8] sm:$0xff]
    %v1068 = vld [vmem:[#allocation5 + $0x10] sm:$0xff]
    %v1069 = vld [vmem:[#allocation5 + $0x18] sm:$0xff]
    %v1070 = vld [vmem:[#allocation5 + $0x20] sm:$0xff]
    %v1071 = vld [vmem:[#allocation5 + $0x28] sm:$0xff]
    %v1072 = vld [vmem:[#allocation5 + $0x30] sm:$0xff]
    %v1073 = vld [vmem:[#allocation5 + $0x38] sm:$0xff]
    %v1074 = vld [vmem:[#allocation5 + $0x40] sm:$0xff]
    %v1075 = vld [vmem:[#allocation5 + $0x48] sm:$0xff]
    %v1076 = vld [vmem:[#allocation5 + $0x50] sm:$0xff]
    %v1077 = vld [vmem:[#allocation5 + $0x58] sm:$0xff]
    %v1078 = vld [vmem:[#allocation5 + $0x60] sm:$0xff]
    %v1079 = vld [vmem:[#allocation5 + $0x68] sm:$0xff]
    %v1080 = vld [vmem:[#allocation5 + $0x70] sm:$0xff]
    %v1081 = vld [vmem:[#allocation5 + $0x78] sm:$0xff]
    %v1082 = vld [vmem:[#allocation5 + $0x80] sm:$0xff]
    %v1083 = vld [vmem:[#allocation5 + $0x88] sm:$0xff]
    %v1084 = vld [vmem:[#allocation5 + $0x90] sm:$0xff]
    %v1085 = vld [vmem:[#allocation5 + $0x98] sm:$0xff]
    %v1086 = vld [vmem:[#allocation5 + $0xa0] sm:$0xff]
    %v1087 = vld [vmem:[#allocation5 + $0xa8] sm:$0xff]
    %v1088 = vld [vmem:[#allocation5 + $0xb0] sm:$0xff]
    %v1089 = vld [vmem:[#allocation5 + $0xb8] sm:$0xff]
    %v1090 = vld [vmem:[#allocation5 + $0xc0] sm:$0xff]
    %v1091 = vld [vmem:[#allocation5 + $0xc8] sm:$0xff]
    %v1092 = vld [vmem:[#allocation5 + $0xd0] sm:$0xff]
    %v1093 = vld [vmem:[#allocation5 + $0xd8] sm:$0xff]
    %v1094 = vld [vmem:[#allocation5 + $0xe0] sm:$0xff]
    %v1095 = vld [vmem:[#allocation5 + $0xe8] sm:$0xff]
    %v1096 = vld [vmem:[#allocation5 + $0xf0] sm:$0xff]
    %v1097 = vld [vmem:[#allocation5 + $0xf8] sm:$0xff]
    %v1098 = vld [vmem:[#allocation5 + $0x100] sm:$0xff]
    %v1099 = vld [vmem:[#allocation5 + $0x108] sm:$0xff]
    %v1100 = vld [vmem:[#allocation5 + $0x110] sm:$0xff]
    %v1101 = vld [vmem:[#allocation5 + $0x118] sm:$0xff]
    %v1102 = vld [vmem:[#allocation8] sm:$0xff]
    %v1103 = vld [vmem:[#allocation8 + $0x8] sm:$0xff]
    %v1104 = vld [vmem:[#allocation8 + $0x10] sm:$0xff]
    %v1105 = vld [vmem:[#allocation8 + $0x18] sm:$0xff]
    %v1106 = vld [vmem:[#allocation8 + $0x20] sm:$0xff]
    %v1107 = vld [vmem:[#allocation8 + $0x28] sm:$0xff]
    %v1108 = vld [vmem:[#allocation8 + $0x30] sm:$0xff]
    %v1109 = vld [vmem:[#allocation8 + $0x38] sm:$0xff]
    %v1110 = vld [vmem:[#allocation8 + $0x40] sm:$0xff]
    %v1111 = vld [vmem:[#allocation8 + $0x48] sm:$0xff]
    %v1112 = vld [vmem:[#allocation8 + $0x50] sm:$0xff]
    %v1113 = vld [vmem:[#allocation8 + $0x58] sm:$0xff]
    %v1114 = vld [vmem:[#allocation8 + $0x60] sm:$0xff]
    %v1115 = vld [vmem:[#allocation8 + $0x68] sm:$0xff]
    %v1116 = vld [vmem:[#allocation8 + $0x70] sm:$0xff]
    %v1117 = vld [vmem:[#allocation8 + $0x78] sm:$0xff]
    %v1118 = vld [vmem:[#allocation8 + $0x80] sm:$0xff]
    %v1119 = vld [vmem:[#allocation8 + $0x88] sm:$0xff]
    %v1120 = vld [vmem:[#allocation8 + $0x90] sm:$0xff]
    %v1121 = vld [vmem:[#allocation8 + $0x98] sm:$0xff]
    %v1122 = vld [vmem:[#allocation8 + $0xa0] sm:$0xff]
    %v1123 = vld [vmem:[#allocation8 + $0xa8] sm:$0xff]
    %v1124 = vld [vmem:[#allocation8 + $0xb0] sm:$0xff]
    %v1125 = vld [vmem:[#allocation8 + $0xb8] sm:$0xff]
    %v1126 = vld [vmem:[#allocation8 + $0xc0] sm:$0xff]
    %v1127 = vld [vmem:[#allocation8 + $0xc8] sm:$0xff]
    %v1128 = vld [vmem:[#allocation8 + $0xd0] sm:$0xff]
    %v1129 = vld [vmem:[#allocation8 + $0xd8] sm:$0xff]
    %v1130 = vld [vmem:[#allocation8 + $0xe0] sm:$0xff]
    %v1131 = vld [vmem:[#allocation8 + $0xe8] sm:$0xff]
    %v1132 = vld [vmem:[#allocation8 + $0xf0] sm:$0xff]
    %v1133 = vld [vmem:[#allocation8 + $0xf8] sm:$0xff]
    %v1134 = vld [vmem:[#allocation8 + $0x100] sm:$0xff]
    %v1135 = vld [vmem:[#allocation8 + $0x108] sm:$0xff]
    %v1136 = vld [vmem:[#allocation8 + $0x110] sm:$0xff]
    %v1137 = vld [vmem:[#allocation8 + $0x118] sm:$0xff]
    %v1138 = vld [vmem:[#allocation8 + $0x120] sm:$0xff]
    %v1139 = vld [vmem:[#allocation8 + $0x128] sm:$0xff]
    %v1140 = vld [vmem:[#allocation8 + $0x130] sm:$0xff]
    %v1141 = vld [vmem:[#allocation8 + $0x138] sm:$0xff]
    %v1142 = vld [vmem:[#allocation8 + $0x140] sm:$0xff]
    %v1143 = vld [vmem:[#allocation8 + $0x148] sm:$0xff]
    %v1144 = vld [vmem:[#allocation8 + $0x150] sm:$0xff]
    %v1145 = vld [vmem:[#allocation8 + $0x158] sm:$0xff]
    %v1146 = vld [vmem:[#allocation8 + $0x160] sm:$0xff]
    %v1147 = vld [vmem:[#allocation8 + $0x168] sm:$0xff]
    %v1148 = vld [vmem:[#allocation8 + $0x170] sm:$0xff]
    %v1149 = vld [vmem:[#allocation8 + $0x178] sm:$0xff]
    %v1150 = vld [vmem:[#allocation8 + $0x180] sm:$0xff]
    %v1151 = vld [vmem:[#allocation8 + $0x188] sm:$0xff]
    %v1152 = vld [vmem:[#allocation8 + $0x190] sm:$0xff]
    %v1153 = vld [vmem:[#allocation8 + $0x198] sm:$0xff]
    %v1154 = vld [vmem:[#allocation8 + $0x1a0] sm:$0xff]
    %v1155 = vld [vmem:[#allocation8 + $0x1a8] sm:$0xff]
    %v1156 = vld [vmem:[#allocation8 + $0x1b0] sm:$0xff]
    %v1157 = vld [vmem:[#allocation8 + $0x1b8] sm:$0xff]
    %v1158 = vld [vmem:[#allocation8 + $0x1c0] sm:$0xff]
    %v1159 = vld [vmem:[#allocation8 + $0x1c8] sm:$0xff]
    %v1160 = vld [vmem:[#allocation8 + $0x1d0] sm:$0xff]
    %v1161 = vld [vmem:[#allocation8 + $0x1d8] sm:$0xff]
    %v1162 = vld [vmem:[#allocation8 + $0x1e0] sm:$0xff]
    %v1163 = vld [vmem:[#allocation8 + $0x1e8] sm:$0xff]
    %v1164 = vld [vmem:[#allocation8 + $0x1f0] sm:$0xff]
    %v1165 = vld [vmem:[#allocation8 + $0x1f8] sm:$0xff]
    %v1166 = vld [vmem:[#allocation8 + $0x200] sm:$0xff]
    %v1167 = vld [vmem:[#allocation8 + $0x208] sm:$0xff]
    %v1168 = vld [vmem:[#allocation8 + $0x210] sm:$0xff]
    %v1169 = vld [vmem:[#allocation8 + $0x218] sm:$0xff]
    %v1170 = vld [vmem:[#allocation8 + $0x220] sm:$0xff]
    %v1171 = vld [vmem:[#allocation8 + $0x228] sm:$0xff]
    %v1172 = vld [vmem:[#allocation8 + $0x230] sm:$0xff]
    %v1173 = vld [vmem:[#allocation8 + $0x238] sm:$0xff]
    %v1174 = vld [vmem:[#allocation8 + $0x240] sm:$0xff]
    %v1175 = vld [vmem:[#allocation8 + $0x248] sm:$0xff]
    %v1176 = vld [vmem:[#allocation8 + $0x250] sm:$0xff]
    %v1177 = vld [vmem:[#allocation8 + $0x258] sm:$0xff]
    %v1178 = vld [vmem:[#allocation8 + $0x260] sm:$0xff]
    %v1179 = vld [vmem:[#allocation8 + $0x268] sm:$0xff]
    %v1180 = vld [vmem:[#allocation8 + $0x270] sm:$0xff]
    %v1181 = vld [vmem:[#allocation8 + $0x278] sm:$0xff]
    %v1182 = vld [vmem:[#allocation8 + $0x280] sm:$0xff]
    %v1183 = vld [vmem:[#allocation8 + $0x288] sm:$0xff]
    %v1184 = vld [vmem:[#allocation8 + $0x290] sm:$0xff]
    %v1185 = vld [vmem:[#allocation8 + $0x298] sm:$0xff]
    %v1186 = vld [vmem:[#allocation8 + $0x2a0] sm:$0xff]
    %v1187 = vld [vmem:[#allocation8 + $0x2a8] sm:$0xff]
    %v1188 = vld [vmem:[#allocation8 + $0x2b0] sm:$0xff]
    %v1189 = vld [vmem:[#allocation8 + $0x2b8] sm:$0xff]
    %v1190 = vld [vmem:[#allocation8 + $0x2c0] sm:$0xff]
    %v1191 = vld [vmem:[#allocation8 + $0x2c8] sm:$0xff]
    %v1192 = vld [vmem:[#allocation8 + $0x2d0] sm:$0xff]
    %v1193 = vld [vmem:[#allocation8 + $0x2d8] sm:$0xff]
    %v1194 = vld [vmem:[#allocation8 + $0x2e0] sm:$0xff]
    %v1195 = vld [vmem:[#allocation8 + $0x2e8] sm:$0xff]
    %v1196 = vld [vmem:[#allocation8 + $0x2f0] sm:$0xff]
    %v1197 = vld [vmem:[#allocation8 + $0x2f8] sm:$0xff]
    %v1198 = vld [vmem:[#allocation8 + $0x300] sm:$0xff]
    %v1199 = vld [vmem:[#allocation8 + $0x308] sm:$0xff]
    %v1200 = vld [vmem:[#allocation8 + $0x310] sm:$0xff]
    %v1201 = vld [vmem:[#allocation8 + $0x318] sm:$0xff]
    %v1202 = vld [vmem:[#allocation8 + $0x320] sm:$0xff]
    %v1203 = vld [vmem:[#allocation8 + $0x328] sm:$0xff]
    %v1204 = vld [vmem:[#allocation8 + $0x330] sm:$0xff]
    %v1205 = vld [vmem:[#allocation8 + $0x338] sm:$0xff]
    %v1206 = vld [vmem:[#allocation8 + $0x340] sm:$0xff]
    %v1207 = vld [vmem:[#allocation8 + $0x348] sm:$0xff]
    %v1208 = vld [vmem:[#allocation8 + $0x350] sm:$0xff]
    %v1209 = vld [vmem:[#allocation8 + $0x358] sm:$0xff]
    %v1210 = vld [vmem:[#allocation8 + $0x360] sm:$0xff]
    %v1211 = vld [vmem:[#allocation8 + $0x368] sm:$0xff]
    %v1212 = vld [vmem:[#allocation8 + $0x370] sm:$0xff]
    %v1213 = vld [vmem:[#allocation8 + $0x378] sm:$0xff]
    %v1214 = vld [vmem:[#allocation8 + $0x380] sm:$0xff]
    %v1215 = vld [vmem:[#allocation8 + $0x388] sm:$0xff]
    %v1216 = vld [vmem:[#allocation8 + $0x390] sm:$0xff]
    %v1217 = vld [vmem:[#allocation8 + $0x398] sm:$0xff]
    %v1218 = vld [vmem:[#allocation8 + $0x3a0] sm:$0xff]
    %v1219 = vld [vmem:[#allocation8 + $0x3a8] sm:$0xff]
    %v1220 = vld [vmem:[#allocation8 + $0x3b0] sm:$0xff]
    %v1221 = vld [vmem:[#allocation8 + $0x3b8] sm:$0xff]
    %v1222 = vld [vmem:[#allocation8 + $0x3c0] sm:$0xff]
    %v1223 = vld [vmem:[#allocation8 + $0x3c8] sm:$0xff]
    %v1224 = vld [vmem:[#allocation8 + $0x3d0] sm:$0xff]
    %v1225 = vld [vmem:[#allocation8 + $0x3d8] sm:$0xff]
    %v1226 = vld [vmem:[#allocation8 + $0x3e0] sm:$0xff]
    %v1227 = vld [vmem:[#allocation8 + $0x3e8] sm:$0xff]
    %v1228 = vld [vmem:[#allocation8 + $0x3f0] sm:$0xff]
    %v1229 = vld [vmem:[#allocation8 + $0x3f8] sm:$0xff]
    %v1230 = vld [vmem:[#allocation8 + $0x400] sm:$0xff]
    %v1231 = vld [vmem:[#allocation8 + $0x408] sm:$0xff]
    %v1232 = vld [vmem:[#allocation8 + $0x410] sm:$0xff]
    %v1233 = vld [vmem:[#allocation8 + $0x418] sm:$0xff]
    %v1234 = vld [vmem:[#allocation8 + $0x420] sm:$0xff]
    %v1235 = vld [vmem:[#allocation8 + $0x428] sm:$0xff]
    %v1236 = vld [vmem:[#allocation8 + $0x430] sm:$0xff]
    %v1237 = vld [vmem:[#allocation8 + $0x438] sm:$0xff]
    %v1238 = vld [vmem:[#allocation8 + $0x440] sm:$0xff]
    %v1239 = vld [vmem:[#allocation8 + $0x448] sm:$0xff]
    %v1240 = vld [vmem:[#allocation8 + $0x450] sm:$0xff]
    %v1241 = vld [vmem:[#allocation8 + $0x458] sm:$0xff]
    %v1242 = vld [vmem:[#allocation8 + $0x460] sm:$0xff]
    %v1243 = vld [vmem:[#allocation8 + $0x468] sm:$0xff]
    %v1244 = vld [vmem:[#allocation8 + $0x470] sm:$0xff]
    %v1245 = vld [vmem:[#allocation8 + $0x478] sm:$0xff]
    %v1246 = vld [vmem:[%s4] sm:$0x1]
    %v1248 = vperm.slane %v1246, 0
    %1250 = vmatpush.msra.mxu0 %v1117
    %1251 = vmatpush.msra.mxu0 %v1116
    %1252 = vmatpush.msra.mxu0 %v1115
    %1253 = vmatpush.msra.mxu0 %v1114
    %1254 = vmatpush.msra.mxu0 %v1113
    %1255 = vmatpush.msra.mxu0 %v1112
    %1256 = vmatpush.msra.mxu0 %v1111
    %1257 = vmatpush.msra.mxu0 %v1110
    %1258 = vmatpush.msra.mxu0 %v1109
    %1259 = vmatpush.msra.mxu0 %v1108
    %1260 = vmatpush.msra.mxu0 %v1107
    %1261 = vmatpush.msra.mxu0 %v1106
    %1262 = vmatpush.msra.mxu0 %v1105
    %1263 = vmatpush.msra.mxu0 %v1104
    %1264 = vmatpush.msra.mxu0 %v1103
    %1265 = vmatpush.msra.mxu0 %v1102
    %1266 = vmatmul.f32.gmra.mxu0 %v1066
    %v1267 = vpop.f32.mrf.mxu0
    %v1268 = vadd.f32 %v1248, %v1267
    %1269 = vmatmul.f32.gmra.mxu0 %v1075
    %v1270 = vpop.f32.mrf.mxu0
    %v1271 = vadd.f32 %v1248, %v1270
    %1272 = vmatmul.f32.gmra.mxu0 %v1084
    %v1273 = vpop.f32.mrf.mxu0
    %v1274 = vadd.f32 %v1248, %v1273
    %1275 = vmatmul.f32.gmra.mxu0 %v1093
    %v1276 = vpop.f32.mrf.mxu0
    %v1277 = vadd.f32 %v1248, %v1276
    %1278 = vdwg.mxu0
    %1279 = vmatpush.msra.mxu0 %v1133
    %1280 = vmatpush.msra.mxu0 %v1132
    %1281 = vmatpush.msra.mxu0 %v1131
    %1282 = vmatpush.msra.mxu0 %v1130
    %1283 = vmatpush.msra.mxu0 %v1129
    %1284 = vmatpush.msra.mxu0 %v1128
    %1285 = vmatpush.msra.mxu0 %v1127
    %1286 = vmatpush.msra.mxu0 %v1126
    %1287 = vmatpush.msra.mxu0 %v1125
    %1288 = vmatpush.msra.mxu0 %v1124
    %1289 = vmatpush.msra.mxu0 %v1123
    %1290 = vmatpush.msra.mxu0 %v1122
    %1291 = vmatpush.msra.mxu0 %v1121
    %1292 = vmatpush.msra.mxu0 %v1120
    %1293 = vmatpush.msra.mxu0 %v1119
    %1294 = vmatpush.msra.mxu0 %v1118
    %1295 = vmatmul.f32.gmra.mxu0 %v1067
    %v1296 = vpop.f32.mrf.mxu0
    %v1297 = vadd.f32 %v1268, %v1296
    %1298 = vmatmul.f32.gmra.mxu0 %v1076
    %v1299 = vpop.f32.mrf.mxu0
    %v1300 = vadd.f32 %v1271, %v1299
    %1301 = vmatmul.f32.gmra.mxu0 %v1085
    %v1302 = vpop.f32.mrf.mxu0
    %v1303 = vadd.f32 %v1274, %v1302
    %1304 = vmatmul.f32.gmra.mxu0 %v1094
    %v1305 = vpop.f32.mrf.mxu0
    %v1306 = vadd.f32 %v1277, %v1305
    %1307 = vdwg.mxu0
    %1308 = vmatpush.msra.mxu0 %v1149
    %1309 = vmatpush.msra.mxu0 %v1148
    %1310 = vmatpush.msra.mxu0 %v1147
    %1311 = vmatpush.msra.mxu0 %v1146
    %1312 = vmatpush.msra.mxu0 %v1145
    %1313 = vmatpush.msra.mxu0 %v1144
    %1314 = vmatpush.msra.mxu0 %v1143
    %1315 = vmatpush.msra.mxu0 %v1142
    %1316 = vmatpush.msra.mxu0 %v1141
    %1317 = vmatpush.msra.mxu0 %v1140
    %1318 = vmatpush.msra.mxu0 %v1139
    %1319 = vmatpush.msra.mxu0 %v1138
    %1320 = vmatpush.msra.mxu0 %v1137
    %1321 = vmatpush.msra.mxu0 %v1136
    %1322 = vmatpush.msra.mxu0 %v1135
    %1323 = vmatpush.msra.mxu0 %v1134
    %1324 = vmatmul.f32.gmra.mxu0 %v1068
    %v1325 = vpop.f32.mrf.mxu0
    %v1326 = vadd.f32 %v1297, %v1325
    %1327 = vmatmul.f32.gmra.mxu0 %v1077
    %v1328 = vpop.f32.mrf.mxu0
    %v1329 = vadd.f32 %v1300, %v1328
    %1330 = vmatmul.f32.gmra.mxu0 %v1086
    %v1331 = vpop.f32.mrf.mxu0
    %v1332 = vadd.f32 %v1303, %v1331
    %1333 = vmatmul.f32.gmra.mxu0 %v1095
    %v1334 = vpop.f32.mrf.mxu0
    %v1335 = vadd.f32 %v1306, %v1334
    %1336 = vdwg.mxu0
    %1337 = vmatpush.msra.mxu0 %v1165
    %1338 = vmatpush.msra.mxu0 %v1164
    %1339 = vmatpush.msra.mxu0 %v1163
    %1340 = vmatpush.msra.mxu0 %v1162
    %1341 = vmatpush.msra.mxu0 %v1161
    %1342 = vmatpush.msra.mxu0 %v1160
    %1343 = vmatpush.msra.mxu0 %v1159
    %1344 = vmatpush.msra.mxu0 %v1158
    %1345 = vmatpush.msra.mxu0 %v1157
    %1346 = vmatpush.msra.mxu0 %v1156
    %1347 = vmatpush.msra.mxu0 %v1155
    %1348 = vmatpush.msra.mxu0 %v1154
    %1349 = vmatpush.msra.mxu0 %v1153
    %1350 = vmatpush.msra.mxu0 %v1152
    %1351 = vmatpush.msra.mxu0 %v1151
    %1352 = vmatpush.msra.mxu0 %v1150
    %1353 = vmatmul.f32.gmra.mxu0 %v1069
    %v1354 = vpop.f32.mrf.mxu0
    %v1355 = vadd.f32 %v1326, %v1354
    %1356 = vmatmul.f32.gmra.mxu0 %v1078
    %v1357 = vpop.f32.mrf.mxu0
    %v1358 = vadd.f32 %v1329, %v1357
    %1359 = vmatmul.f32.gmra.mxu0 %v1087
    %v1360 = vpop.f32.mrf.mxu0
    %v1361 = vadd.f32 %v1332, %v1360
    %1362 = vmatmul.f32.gmra.mxu0 %v1096
    %v1363 = vpop.f32.mrf.mxu0
    %v1364 = vadd.f32 %v1335, %v1363
    %1365 = vdwg.mxu0
    %1366 = vmatpush.msra.mxu0 %v1181
    %1367 = vmatpush.msra.mxu0 %v1180
    %1368 = vmatpush.msra.mxu0 %v1179
    %1369 = vmatpush.msra.mxu0 %v1178
    %1370 = vmatpush.msra.mxu0 %v1177
    %1371 = vmatpush.msra.mxu0 %v1176
    %1372 = vmatpush.msra.mxu0 %v1175
    %1373 = vmatpush.msra.mxu0 %v1174
    %1374 = vmatpush.msra.mxu0 %v1173
    %1375 = vmatpush.msra.mxu0 %v1172
    %1376 = vmatpush.msra.mxu0 %v1171
    %1377 = vmatpush.msra.mxu0 %v1170
    %1378 = vmatpush.msra.mxu0 %v1169
    %1379 = vmatpush.msra.mxu0 %v1168
    %1380 = vmatpush.msra.mxu0 %v1167
    %1381 = vmatpush.msra.mxu0 %v1166
    %1382 = vmatmul.f32.gmra.mxu0 %v1070
    %v1383 = vpop.f32.mrf.mxu0
    %v1384 = vadd.f32 %v1355, %v1383
    %1385 = vmatmul.f32.gmra.mxu0 %v1079
    %v1386 = vpop.f32.mrf.mxu0
    %v1387 = vadd.f32 %v1358, %v1386
    %1388 = vmatmul.f32.gmra.mxu0 %v1088
    %v1389 = vpop.f32.mrf.mxu0
    %v1390 = vadd.f32 %v1361, %v1389
    %1391 = vmatmul.f32.gmra.mxu0 %v1097
    %v1392 = vpop.f32.mrf.mxu0
    %v1393 = vadd.f32 %v1364, %v1392
    %1394 = vdwg.mxu0
    %1395 = vmatpush.msra.mxu0 %v1197
    %1396 = vmatpush.msra.mxu0 %v1196
    %1397 = vmatpush.msra.mxu0 %v1195
    %1398 = vmatpush.msra.mxu0 %v1194
    %1399 = vmatpush.msra.mxu0 %v1193
    %1400 = vmatpush.msra.mxu0 %v1192
    %1401 = vmatpush.msra.mxu0 %v1191
    %1402 = vmatpush.msra.mxu0 %v1190
    %1403 = vmatpush.msra.mxu0 %v1189
    %1404 = vmatpush.msra.mxu0 %v1188
    %1405 = vmatpush.msra.mxu0 %v1187
    %1406 = vmatpush.msra.mxu0 %v1186
    %1407 = vmatpush.msra.mxu0 %v1185
    %1408 = vmatpush.msra.mxu0 %v1184
    %1409 = vmatpush.msra.mxu0 %v1183
    %1410 = vmatpush.msra.mxu0 %v1182
    %1411 = vmatmul.f32.gmra.mxu0 %v1071
    %v1412 = vpop.f32.mrf.mxu0
    %v1413 = vadd.f32 %v1384, %v1412
    %1414 = vmatmul.f32.gmra.mxu0 %v1080
    %v1415 = vpop.f32.mrf.mxu0
    %v1416 = vadd.f32 %v1387, %v1415
    %1417 = vmatmul.f32.gmra.mxu0 %v1089
    %v1418 = vpop.f32.mrf.mxu0
    %v1419 = vadd.f32 %v1390, %v1418
    %1420 = vmatmul.f32.gmra.mxu0 %v1098
    %v1421 = vpop.f32.mrf.mxu0
    %v1422 = vadd.f32 %v1393, %v1421
    %1423 = vdwg.mxu0
    %1424 = vmatpush.msra.mxu0 %v1213
    %1425 = vmatpush.msra.mxu0 %v1212
    %1426 = vmatpush.msra.mxu0 %v1211
    %1427 = vmatpush.msra.mxu0 %v1210
    %1428 = vmatpush.msra.mxu0 %v1209
    %1429 = vmatpush.msra.mxu0 %v1208
    %1430 = vmatpush.msra.mxu0 %v1207
    %1431 = vmatpush.msra.mxu0 %v1206
    %1432 = vmatpush.msra.mxu0 %v1205
    %1433 = vmatpush.msra.mxu0 %v1204
    %1434 = vmatpush.msra.mxu0 %v1203
    %1435 = vmatpush.msra.mxu0 %v1202
    %1436 = vmatpush.msra.mxu0 %v1201
    %1437 = vmatpush.msra.mxu0 %v1200
    %1438 = vmatpush.msra.mxu0 %v1199
    %1439 = vmatpush.msra.mxu0 %v1198
    %1440 = vmatmul.f32.gmra.mxu0 %v1072
    %v1441 = vpop.f32.mrf.mxu0
    %v1442 = vadd.f32 %v1413, %v1441
    %1443 = vmatmul.f32.gmra.mxu0 %v1081
    %v1444 = vpop.f32.mrf.mxu0
    %v1445 = vadd.f32 %v1416, %v1444
    %1446 = vmatmul.f32.gmra.mxu0 %v1090
    %v1447 = vpop.f32.mrf.mxu0
    %v1448 = vadd.f32 %v1419, %v1447
    %1449 = vmatmul.f32.gmra.mxu0 %v1099
    %v1450 = vpop.f32.mrf.mxu0
    %v1451 = vadd.f32 %v1422, %v1450
    %1452 = vdwg.mxu0
    %1453 = vmatpush.msra.mxu0 %v1229
    %1454 = vmatpush.msra.mxu0 %v1228
    %1455 = vmatpush.msra.mxu0 %v1227
    %1456 = vmatpush.msra.mxu0 %v1226
    %1457 = vmatpush.msra.mxu0 %v1225
    %1458 = vmatpush.msra.mxu0 %v1224
    %1459 = vmatpush.msra.mxu0 %v1223
    %1460 = vmatpush.msra.mxu0 %v1222
    %1461 = vmatpush.msra.mxu0 %v1221
    %1462 = vmatpush.msra.mxu0 %v1220
    %1463 = vmatpush.msra.mxu0 %v1219
    %1464 = vmatpush.msra.mxu0 %v1218
    %1465 = vmatpush.msra.mxu0 %v1217
    %1466 = vmatpush.msra.mxu0 %v1216
    %1467 = vmatpush.msra.mxu0 %v1215
    %1468 = vmatpush.msra.mxu0 %v1214
    %1469 = vmatmul.f32.gmra.mxu0 %v1073
    %v1470 = vpop.f32.mrf.mxu0
    %v1471 = vadd.f32 %v1442, %v1470
    %1472 = vmatmul.f32.gmra.mxu0 %v1082
    %v1473 = vpop.f32.mrf.mxu0
    %v1474 = vadd.f32 %v1445, %v1473
    %1475 = vmatmul.f32.gmra.mxu0 %v1091
    %v1476 = vpop.f32.mrf.mxu0
    %v1477 = vadd.f32 %v1448, %v1476
    %1478 = vmatmul.f32.gmra.mxu0 %v1100
    %v1479 = vpop.f32.mrf.mxu0
    %v1480 = vadd.f32 %v1451, %v1479
    %1481 = vdwg.mxu0
    %1482 = vmatpush.msra.mxu0 %v1245
    %1483 = vmatpush.msra.mxu0 %v1244
    %1484 = vmatpush.msra.mxu0 %v1243
    %1485 = vmatpush.msra.mxu0 %v1242
    %1486 = vmatpush.msra.mxu0 %v1241
    %1487 = vmatpush.msra.mxu0 %v1240
    %1488 = vmatpush.msra.mxu0 %v1239
    %1489 = vmatpush.msra.mxu0 %v1238
    %1490 = vmatpush.msra.mxu0 %v1237
    %1491 = vmatpush.msra.mxu0 %v1236
    %1492 = vmatpush.msra.mxu0 %v1235
    %1493 = vmatpush.msra.mxu0 %v1234
    %1494 = vmatpush.msra.mxu0 %v1233
    %1495 = vmatpush.msra.mxu0 %v1232
    %1496 = vmatpush.msra.mxu0 %v1231
    %1497 = vmatpush.msra.mxu0 %v1230
    %1498 = vmatmul.f32.gmra.mxu0 %v1074
    %v1499 = vpop.f32.mrf.mxu0
    %v1500 = vadd.f32 %v1471, %v1499
    %1501 = vmatmul.f32.gmra.mxu0 %v1083
    %v1502 = vpop.f32.mrf.mxu0
    %v1503 = vadd.f32 %v1474, %v1502
    %1504 = vmatmul.f32.gmra.mxu0 %v1092
    %v1505 = vpop.f32.mrf.mxu0
    %v1506 = vadd.f32 %v1477, %v1505
    %1507 = vmatmul.f32.gmra.mxu0 %v1101
    %v1508 = vpop.f32.mrf.mxu0
    %v1509 = vadd.f32 %v1480, %v1508
    %1510 = vdwg.mxu0
    %v1511 = vmax.f32 %v1500, 0.0
    %v1512 = vmax.f32 %v1503, 0.0
    %v1513 = vmax.f32 %v1506, 0.0
    %v1514 = vmax.f32 %v1509, 0.0
    %1515 = vst [vmem:[%s5] sm:$0xff] %v1511
    %1516 = vst [vmem:[%s5 + $0x8] sm:$0xff] %v1512
    %1517 = vst [vmem:[%s5 + $0x10] sm:$0xff] %v1513
    %1518 = vst [vmem:[%s5 + $0x18] sm:$0xff] %v1514
    // Predicated region
    $region30: #{conv_block_apply_nchw.1} parent=1 // pred_check
      _
    $region31: #{conv_block_apply_nchw.1} parent=1 // pred_check_branch
      %1520 = sbr.rel (0) target = $region33
    $region32: #{conv_block_apply_nchw.1} parent=1 // pred_region
      _
    $region33: #{conv_block_apply_nchw.1} parent=1 // pred_fallthru
      _
    // Predicated region
    $region34: #{conv_block_apply_nchw.1} parent=1 // pred_check
      _
    $region35: #{conv_block_apply_nchw.1} parent=1 // pred_check_branch
      %1522 = sbr.rel (0) target = $region37
    $region36: #{conv_block_apply_nchw.1} parent=1 // pred_region
      _
    $region37: #{conv_block_apply_nchw.1} parent=1 // pred_fallthru
      _
    %1523 = vsyncpa [#allocation7], 1
    %1524 = vsyncpa [#allocation9], 1

</llo_original>
